<compile_context>
chip_gen: v5e
topology: v5e:2x2
jax: 0.10.0
libtpu: 0.0.40
codegen_flags: <defaults>
</compile_context>

<pallas_src>
from functools import partial

import numpy as np
import jax
import jax.numpy as jnp
from jax.experimental import pallas as pl
from jax.experimental.pallas import tpu as pltpu


ACT_DTYPE = jnp.bfloat16   # inter-layer activation storage dtype (HBM traffic)
EPS = 1e-5
MAX_LANE_TILE = 4096       # vertices per grid step (lane axis), multiple of 128


def _round_up(x, m):
    return ((x + m - 1) // m) * m


def _pick_tile(num_vertices):
    """Lane-tile size: as large as useful, multiple of 128, >=2 tiles for v7x."""
    vp = _round_up(max(int(num_vertices), 1), 128)
    if vp <= 512:
        return vp                              # tiny mesh: single tile
    return min(MAX_LANE_TILE, _round_up(vp // 2, 128))


# ----------------------------------------------------------------------------
# Pallas kernels (lane-dense transposed layout: features are (C, V_tile)).
# ----------------------------------------------------------------------------
def _layer_norm_relu(y, gamma, beta):
    """LayerNorm over the channel (sublane) axis followed by ReLU, in f32."""
    mu = jnp.mean(y, axis=0, keepdims=True)
    var = jnp.mean((y - mu) ** 2, axis=0, keepdims=True)
    y = (y - mu) * jax.lax.rsqrt(var + EPS) * gamma + beta
    return jnp.maximum(y, 0.0)


def _layer0_kernel(x_ref, ax_ref, w_ref, p_ref, h_ref, skip_ref):
    # x_ref / ax_ref : (1, T) f32  -- single real input channel.
    # w_ref          : (F, 4) f32  columns [w_skip_self, w_skip_neigh, w0_self, w0_neigh]
    # p_ref          : (F, 4) f32  columns [b_skip, b0, gamma0, beta0]
    x = x_ref[...]
    ax = ax_ref[...]
    w = w_ref[...]
    p = p_ref[...]
    # Rank-1 outer products on the VPU (no MXU work over zero-padded rows).
    skip = w[:, 0:1] * x + w[:, 1:2] * ax + p[:, 0:1]          # (F, T)
    skip_ref[...] = skip.astype(skip_ref.dtype)
    h = w[:, 2:3] * x + w[:, 3:4] * ax + p[:, 1:2]             # (F, T)
    h_ref[...] = _layer_norm_relu(h, p[:, 2:3], p[:, 3:4]).astype(h_ref.dtype)


def _hidden_kernel(h_ref, ah_ref, w_ref, p_ref, out_ref):
    # w_ref: (2, F, F) = [w_self, w_neigh]; p_ref: (F, 3) = [b, gamma, beta]
    h = h_ref[...].astype(jnp.float32)
    ah = ah_ref[...].astype(jnp.float32)
    y = (jnp.dot(w_ref[0], h, preferred_element_type=jnp.float32)
         + jnp.dot(w_ref[1], ah, preferred_element_type=jnp.float32))
    p = p_ref[...]
    y = y + p[:, 0:1]
    out_ref[...] = _layer_norm_relu(y, p[:, 1:2], p[:, 2:3]).astype(out_ref.dtype)


def _hidden_residual_kernel(h_ref, ah_ref, res_ref, w_ref, p_ref, out_ref):
    h = h_ref[...].astype(jnp.float32)
    ah = ah_ref[...].astype(jnp.float32)
    y = (jnp.dot(w_ref[0], h, preferred_element_type=jnp.float32)
         + jnp.dot(w_ref[1], ah, preferred_element_type=jnp.float32))
    p = p_ref[...]
    y = _layer_norm_relu(y + p[:, 0:1], p[:, 1:2], p[:, 2:3])
    out_ref[...] = (y + res_ref[...].astype(jnp.float32)).astype(out_ref.dtype)


# ----------------------------------------------------------------------------
# pallas_call wrappers.
# ----------------------------------------------------------------------------
def _feat_spec(rows, tile):
    return pl.BlockSpec((rows, tile), lambda i: (0, i))


def _resident_spec(arr):
    # Full-array block, constant block index -> stays VMEM-resident across steps.
    shape = tuple(int(s) for s in arr.shape)
    return pl.BlockSpec(shape, lambda i: (0,) * len(shape))


def _layer0_call(x, ax, W0, P0, tile):
    _, VP = x.shape
    F = int(W0.shape[0])
    cost = pl.CostEstimate(
        flops=int(16 * F * VP),
        transcendentals=int(VP),
        bytes_accessed=int(2 * VP * 4 + 2 * F * VP * 2
                           + 4 * (int(W0.size) + int(P0.size))))
    return pl.pallas_call(
        _layer0_kernel,
        grid=(VP // tile,),
        in_specs=[_feat_spec(1, tile), _feat_spec(1, tile),
                  _resident_spec(W0), _resident_spec(P0)],
        out_specs=(_feat_spec(F, tile), _feat_spec(F, tile)),
        out_shape=(jax.ShapeDtypeStruct((F, VP), ACT_DTYPE),
                   jax.ShapeDtypeStruct((F, VP), ACT_DTYPE)),
        compiler_params=pltpu.CompilerParams(dimension_semantics=("parallel",)),
        cost_estimate=cost,
    )(x, ax, W0, P0)


def _hidden_call(h, ah, W, P, tile, res=None, out_dtype=ACT_DTYPE):
    F, VP = (int(s) for s in h.shape)
    if res is None:
        kernel, feat_in = _hidden_kernel, [h, ah]
    else:
        kernel, feat_in = _hidden_residual_kernel, [h, ah, res]
    cost = pl.CostEstimate(
        flops=int((4 * F * F + 12 * F) * VP),
        transcendentals=int(VP),
        bytes_accessed=int(len(feat_in) * F * VP * 2
                           + F * VP * np.dtype(out_dtype).itemsize
                           + 4 * (int(W.size) + int(P.size))))
    in_specs = [_feat_spec(F, tile) for _ in feat_in] + \
               [_resident_spec(W), _resident_spec(P)]
    return pl.pallas_call(
        kernel,
        grid=(VP // tile,),
        in_specs=in_specs,
        out_specs=_feat_spec(F, tile),
        out_shape=jax.ShapeDtypeStruct((F, VP), out_dtype),
        compiler_params=pltpu.CompilerParams(dimension_semantics=("parallel",)),
        cost_estimate=cost,
    )(*feat_in, W, P)


def _aggregate(hT, conn, dist):
    """Sparse distance-weighted neighbor sum, O(7*V*C).

    Unrolled over the 7 real neighbor slots (slot 0 is the vertex itself with
    weight 0): no (C, VP, 8) intermediate; each slot is a (C, VP) gather
    multiply-accumulated in f32 and fused by XLA."""
    acc = jnp.take(hT, conn[:, 1], axis=1).astype(jnp.float32) * dist[None, :, 1]
    for k in range(2, 8):
        acc = acc + (jnp.take(hT, conn[:, k], axis=1).astype(jnp.float32)
                     * dist[None, :, k])
    return acc.astype(hT.dtype)


@partial(jax.jit, static_argnames=("tile",))
def _forward_device(x0, conn, dist, W0, P0, W1, P1, W2, P2, *, tile):
    ax0 = _aggregate(x0, conn, dist)                         # (1, VP) f32
    h0, skip = _layer0_call(x0, ax0, W0, P0, tile)           # fused skip + GC0->LN->ReLU
    ah0 = _aggregate(h0, conn, dist)
    h1 = _hidden_call(h0, ah0, W1, P1, tile)                 # GC1->LN->ReLU
    ah1 = _aggregate(h1, conn, dist)
    return _hidden_call(h1, ah1, W2, P2, tile,               # GC2->LN->ReLU + skip
                        res=skip, out_dtype=jnp.float32)


# ----------------------------------------------------------------------------
# Host-side mesh -> adjacency (vectorized numpy; mirrors the reference loops).
# ----------------------------------------------------------------------------
def _build_adjacency(verts, faces):
    e = np.concatenate([faces[:, [0, 1]], faces[:, [1, 2]], faces[:, [0, 2]]], 0)
    edges = np.unique(np.sort(e.astype(np.int64), axis=1), axis=0)        # (E, 2)
    num_vertices = int(edges.max()) + 1

    # Directed pairs in the reference's iteration order (v1->v2, then v2->v1).
    ne = edges.shape[0]
    src = np.empty(2 * ne, np.int64)
    dst = np.empty(2 * ne, np.int64)
    src[0::2], dst[0::2] = edges[:, 0], edges[:, 1]
    src[1::2], dst[1::2] = edges[:, 1], edges[:, 0]
    order = np.argsort(src, kind="stable")
    src, dst = src[order], dst[order]

    counts = np.bincount(src, minlength=num_vertices)
    starts = np.concatenate([[0], np.cumsum(counts)[:-1]])
    slot = np.arange(src.size) - starts[src]                 # position in neighbor list

    dd = np.sqrt(((verts[src] - verts[dst]) ** 2).sum(-1)).astype(np.float32)
    row_sum = np.zeros(num_vertices, np.float32)
    np.add.at(row_sum, src, dd)
    safe_sum = np.where(row_sum > 0.0, row_sum, 1.0)         # guard degenerate rows

    conn = np.full((num_vertices, 8), num_vertices, np.int32)   # int32 authoritative
    conn[:, 0] = np.arange(num_vertices, dtype=np.int32)
    dist = np.zeros((num_vertices, 8), np.float32)
    dist_raw = np.zeros((num_vertices, 8), np.float32)
    keep = slot < 7                                          # reference assumes degree <= 7
    r, c = src[keep], slot[keep] + 1
    conn[r, c] = dst[keep].astype(np.int32)
    dist_raw[r, c] = dd[keep]
    dist[r, c] = dd[keep] / safe_sum[r]
    return conn, dist, dist_raw, num_vertices


# ----------------------------------------------------------------------------
# SurfNN equivalent.
# ----------------------------------------------------------------------------
class SurfNNPallas:
    CIN = 1    # graph_conv_first has in_features = 1 (the mgh feature)

    def __init__(self, n_in_channels=3, n_start_filters=8,
                 key=jax.random.PRNGKey(1)):
        # n_in_channels is unused by the reference forward() as well.
        self.F = int(n_start_filters)
        F = self.F
        keys = jax.random.split(key, 4)

        def scalar_gc(k):                       # 1 -> F GraphConv weights
            k1, k2 = jax.random.split(k)
            ws = jax.random.normal(k1, (F,), jnp.float32)
            wn = jax.random.normal(k2, (F,), jnp.float32)
            return ws, wn

        def mat_gc(k):                          # F -> F GraphConv weights (out, in)
            k1, k2 = jax.random.split(k)
            s = 1.0 / np.sqrt(F)
            ws = (jax.random.normal(k1, (F, F)) * s).astype(jnp.float32)
            wn = (jax.random.normal(k2, (F, F)) * s).astype(jnp.float32)
            return jnp.stack([ws, wn], axis=0)  # (2, F, F) = [self | neighbor]

        wrs, wrn = scalar_gc(keys[0])           # residual skip GC (1 -> F)
        w0s, w0n = scalar_gc(keys[1])           # first GC (1 -> F)
        self.W0 = jnp.stack([wrs, wrn, w0s, w0n], axis=1)          # (F, 4)
        self.W1 = mat_gc(keys[2])                                   # (2, F, F)
        self.W2 = mat_gc(keys[3])                                   # (2, F, F)

        zeros = jnp.zeros((F,), jnp.float32)
        ones = jnp.ones((F,), jnp.float32)
        self.P0 = jnp.stack([zeros, zeros, ones, zeros], axis=1)   # [b_skip, b0, g0, be0]
        self.P1 = jnp.stack([zeros, ones, zeros], axis=1)          # [b, gamma, beta]
        self.P2 = jnp.stack([zeros, ones, zeros], axis=1)
        # TODO(synk): gc1 / gc1_f2v from the reference __init__ are never used
        # in forward(); their parameters are not materialized here.

    def forward(self, mgh, f, v, n_smooth=1, lambd=1.0):
        verts_np = np.asarray(v, np.float32).reshape(-1, 3)        # verts_packed
        faces_np = np.asarray(f, np.int64).reshape(-1, 3)
        conn_i, dist, dist_raw, V = _build_adjacency(verts_np, faces_np)

        tile = _pick_tile(V)
        VP = _round_up(V, tile)                                    # lane padding

        conn_pad = np.zeros((VP, 8), np.int32)
        conn_pad[:V] = np.where(conn_i < V, conn_i, 0)             # clip empty-slot sentinel
        dist_pad = np.zeros((VP, 8), np.float32)                   # 0-weight pads
        dist_pad[:V] = dist

        x0 = np.zeros((1, VP), np.float32)                         # single real channel
        x0[0, :V] = np.asarray(mgh, np.float32).reshape(-1)[:V]

        outT = _forward_device(jnp.asarray(x0), jnp.asarray(conn_pad),
                               jnp.asarray(dist_pad),
                               self.W0, self.P0, self.W1, self.P1,
                               self.W2, self.P2, tile=tile)
        features = outT[:, :V].T.astype(jnp.float32)               # back to (V, F)
        conn_f = jnp.asarray(conn_i.astype(np.float32))            # float copy for return only
        return (features[None],                                    # .unsqueeze(0)
                conn_f, jnp.asarray(dist), jnp.asarray(dist_raw))


# ----------------------------------------------------------------------------
# Example run.
# ----------------------------------------------------------------------------
def make_grid_mesh(nr, nc):
    rr, cc = np.meshgrid(np.arange(nr, dtype=np.float32),
                         np.arange(nc, dtype=np.float32), indexing="ij")
    verts = np.stack([rr * 0.1, cc * 0.1, np.zeros_like(rr)], -1).reshape(-1, 3)
    idx = np.arange(nr * nc).reshape(nr, nc)
    v00 = idx[:-1, :-1].reshape(-1)
    v01, v10 = v00 + 1, v00 + nc
    v11 = v10 + 1
    faces = np.concatenate([np.stack([v00, v10, v01], -1),
                            np.stack([v01, v10, v11], -1)], axis=0)
    return verts.astype(np.float32), faces.astype(np.int32)


if __name__ == "__main__":
    key = jax.random.PRNGKey(0)
    k_z, k_mgh, k_model = jax.random.split(key, 3)

    nr, nc = 24, 24                      # 576 vertices -> 2 lane tiles of 384
    verts, faces = make_grid_mesh(nr, nc)
    V = verts.shape[0]
    verts[:, 2] = np.asarray(jax.random.normal(k_z, (V,)) * 0.05, np.float32)

    v = jnp.asarray(verts)[None]                           # (1, V, 3)
    f = jnp.asarray(faces)[None]                           # (1, F, 3)
    mgh = jax.random.normal(k_mgh, (V, 1), jnp.float32)    # per-vertex scalar

    model = SurfNNPallas(n_in_channels=3, n_start_filters=8, key=k_model)
    features, conn, dist, dist_ = model.forward(mgh, f, v)
    jax.block_until_ready(features)

    assert features.shape == (1, V, 8)
    assert conn.shape == (V, 8) and dist.shape == (V, 8) and dist_.shape == (V, 8)
    assert bool(jnp.all(jnp.isfinite(features)))
    print("KERNEL_OK")
</pallas_src>

<mosaic_0001>
module attributes {stable_mosaic.version = 11 : i64} {
  func.func @_layer0_kernel(%arg0: i32, %arg1: memref<1x384xf32, #tpu.memory_space<vmem>>, %arg2: memref<1x384xf32, #tpu.memory_space<vmem>>, %arg3: memref<8x4xf32, #tpu.memory_space<vmem>>, %arg4: memref<8x4xf32, #tpu.memory_space<vmem>>, %arg5: memref<8x384xbf16, #tpu.memory_space<vmem>>, %arg6: memref<8x384xbf16, #tpu.memory_space<vmem>>) attributes {dimension_semantics = [#tpu.dimension_semantics<parallel>], iteration_bounds = array<i64: 2>, scalar_prefetch = 0 : i64, scratch_operands = 0 : i64, tpu.core_type = #tpu.core_type<tc>, window_params = [{transform_indices = @transform_0, window_bounds = array<i64: 1, 384>}, {transform_indices = @transform_1, window_bounds = array<i64: 1, 384>}, {pipeline_mode = #tpu.pipeline_mode<synchronous>, transform_indices = @transform_2, window_bounds = array<i64: 8, 4>}, {pipeline_mode = #tpu.pipeline_mode<synchronous>, transform_indices = @transform_3, window_bounds = array<i64: 8, 4>}, {transform_indices = @transform_4, window_bounds = array<i64: 8, 384>}, {transform_indices = @transform_5, window_bounds = array<i64: 8, 384>}]} {
    %c0 = arith.constant 0 : index
    %c0_0 = arith.constant 0 : index
    %0 = vector.load %arg1[%c0, %c0_0] : memref<1x384xf32, #tpu.memory_space<vmem>>, vector<1x384xf32>
    %c0_1 = arith.constant 0 : index
    %c0_2 = arith.constant 0 : index
    %1 = vector.load %arg2[%c0_1, %c0_2] : memref<1x384xf32, #tpu.memory_space<vmem>>, vector<1x384xf32>
    %c0_3 = arith.constant 0 : index
    %c0_4 = arith.constant 0 : index
    %2 = vector.load %arg3[%c0_3, %c0_4] : memref<8x4xf32, #tpu.memory_space<vmem>>, vector<8x4xf32>
    %c0_5 = arith.constant 0 : index
    %c0_6 = arith.constant 0 : index
    %3 = vector.load %arg4[%c0_5, %c0_6] : memref<8x4xf32, #tpu.memory_space<vmem>>, vector<8x4xf32>
    %4 = vector.extract_strided_slice %2 {offsets = [0, 0], sizes = [8, 1], strides = [1, 1]} : vector<8x4xf32> to vector<8x1xf32>
    %5 = vector.broadcast %4 : vector<8x1xf32> to vector<8x384xf32>
    %6 = vector.broadcast %0 : vector<1x384xf32> to vector<8x384xf32>
    %7 = arith.mulf %5, %6 : vector<8x384xf32>
    %8 = vector.extract_strided_slice %2 {offsets = [0, 1], sizes = [8, 1], strides = [1, 1]} : vector<8x4xf32> to vector<8x1xf32>
    %9 = vector.broadcast %8 : vector<8x1xf32> to vector<8x384xf32>
    %10 = vector.broadcast %1 : vector<1x384xf32> to vector<8x384xf32>
    %11 = arith.mulf %9, %10 : vector<8x384xf32>
    %12 = arith.addf %7, %11 : vector<8x384xf32>
    %13 = vector.extract_strided_slice %3 {offsets = [0, 0], sizes = [8, 1], strides = [1, 1]} : vector<8x4xf32> to vector<8x1xf32>
    %14 = vector.broadcast %13 : vector<8x1xf32> to vector<8x384xf32>
    %15 = arith.addf %12, %14 : vector<8x384xf32>
    %16 = arith.truncf %15 : vector<8x384xf32> to vector<8x384xbf16>
    %c0_7 = arith.constant 0 : index
    %c0_8 = arith.constant 0 : index
    %17 = vector.load %arg6[%c0_7, %c0_8] : memref<8x384xbf16, #tpu.memory_space<vmem>>, vector<8x384xbf16>
    tpu.vector_store %arg6[%c0_7, %c0_8], %16 {strides = array<i32>} : memref<8x384xbf16, #tpu.memory_space<vmem>>, vector<8x384xbf16>,
    %18 = vector.extract_strided_slice %2 {offsets = [0, 2], sizes = [8, 1], strides = [1, 1]} : vector<8x4xf32> to vector<8x1xf32>
    %19 = vector.broadcast %18 : vector<8x1xf32> to vector<8x384xf32>
    %20 = vector.broadcast %0 : vector<1x384xf32> to vector<8x384xf32>
    %21 = arith.mulf %19, %20 : vector<8x384xf32>
    %22 = vector.extract_strided_slice %2 {offsets = [0, 3], sizes = [8, 1], strides = [1, 1]} : vector<8x4xf32> to vector<8x1xf32>
    %23 = vector.broadcast %22 : vector<8x1xf32> to vector<8x384xf32>
    %24 = vector.broadcast %1 : vector<1x384xf32> to vector<8x384xf32>
    %25 = arith.mulf %23, %24 : vector<8x384xf32>
    %26 = arith.addf %21, %25 : vector<8x384xf32>
    %27 = vector.extract_strided_slice %3 {offsets = [0, 1], sizes = [8, 1], strides = [1, 1]} : vector<8x4xf32> to vector<8x1xf32>
    %28 = vector.broadcast %27 : vector<8x1xf32> to vector<8x384xf32>
    %29 = arith.addf %26, %28 : vector<8x384xf32>
    %30 = vector.extract_strided_slice %3 {offsets = [0, 2], sizes = [8, 1], strides = [1, 1]} : vector<8x4xf32> to vector<8x1xf32>
    %31 = vector.extract_strided_slice %3 {offsets = [0, 3], sizes = [8, 1], strides = [1, 1]} : vector<8x4xf32> to vector<8x1xf32>
    %cst = arith.constant dense<0.000000e+00> : vector<384xf32>
    %32 = vector.multi_reduction <add>, %29, %cst [0] : vector<8x384xf32> to vector<384xf32>
    %33 = vector.shape_cast %32 : vector<384xf32> to vector<1x384xf32>
    %cst_9 = arith.constant 8.000000e+00 : f32
    %34 = vector.broadcast %cst_9 : f32 to vector<1x384xf32>
    %35 = arith.divf %33, %34 : vector<1x384xf32>
    %36 = vector.broadcast %35 : vector<1x384xf32> to vector<8x384xf32>
    %37 = arith.subf %29, %36 : vector<8x384xf32>
    %38 = arith.mulf %37, %37 : vector<8x384xf32>
    %cst_10 = arith.constant dense<0.000000e+00> : vector<384xf32>
    %39 = vector.multi_reduction <add>, %38, %cst_10 [0] : vector<8x384xf32> to vector<384xf32>
    %40 = vector.shape_cast %39 : vector<384xf32> to vector<1x384xf32>
    %cst_11 = arith.constant 8.000000e+00 : f32
    %41 = vector.broadcast %cst_11 : f32 to vector<1x384xf32>
    %42 = arith.divf %40, %41 : vector<1x384xf32>
    %43 = vector.broadcast %35 : vector<1x384xf32> to vector<8x384xf32>
    %44 = arith.subf %29, %43 : vector<8x384xf32>
    %cst_12 = arith.constant 9.99999974E-6 : f32
    %45 = vector.broadcast %cst_12 : f32 to vector<1x384xf32>
    %46 = arith.addf %42, %45 : vector<1x384xf32>
    %47 = math.rsqrt %46 : vector<1x384xf32>
    %48 = vector.broadcast %47 : vector<1x384xf32> to vector<8x384xf32>
    %49 = arith.mulf %44, %48 : vector<8x384xf32>
    %50 = vector.broadcast %30 : vector<8x1xf32> to vector<8x384xf32>
    %51 = arith.mulf %49, %50 : vector<8x384xf32>
    %52 = vector.broadcast %31 : vector<8x1xf32> to vector<8x384xf32>
    %53 = arith.addf %51, %52 : vector<8x384xf32>
    %cst_13 = arith.constant 0.000000e+00 : f32
    %54 = vector.broadcast %cst_13 : f32 to vector<8x384xf32>
    %55 = arith.maximumf %53, %54 : vector<8x384xf32>
    %56 = arith.truncf %55 : vector<8x384xf32> to vector<8x384xbf16>
    %c0_14 = arith.constant 0 : index
    %c0_15 = arith.constant 0 : index
    %57 = vector.load %arg5[%c0_14, %c0_15] : memref<8x384xbf16, #tpu.memory_space<vmem>>, vector<8x384xbf16>
    tpu.vector_store %arg5[%c0_14, %c0_15], %56 {strides = array<i32>} : memref<8x384xbf16, #tpu.memory_space<vmem>>, vector<8x384xbf16>,
    return
  }
  func.func @transform_0(%arg0: i32) -> (i32, i32) {
    %c0_i32 = arith.constant 0 : i32
    %c0_i32_0 = arith.constant 0 : i32
    return %c0_i32, %arg0 : i32, i32
  }
  func.func @transform_1(%arg0: i32) -> (i32, i32) {
    %c0_i32 = arith.constant 0 : i32
    %c0_i32_0 = arith.constant 0 : i32
    return %c0_i32, %arg0 : i32, i32
  }
  func.func @transform_2(%arg0: i32) -> (i32, i32) {
    %c0_i32 = arith.constant 0 : i32
    %c0_i32_0 = arith.constant 0 : i32
    %c0_i32_1 = arith.constant 0 : i32
    return %c0_i32, %c0_i32_0 : i32, i32
  }
  func.func @transform_3(%arg0: i32) -> (i32, i32) {
    %c0_i32 = arith.constant 0 : i32
    %c0_i32_0 = arith.constant 0 : i32
    %c0_i32_1 = arith.constant 0 : i32
    return %c0_i32, %c0_i32_0 : i32, i32
  }
  func.func @transform_4(%arg0: i32) -> (i32, i32) {
    %c0_i32 = arith.constant 0 : i32
    %c0_i32_0 = arith.constant 0 : i32
    return %c0_i32, %arg0 : i32, i32
  }
  func.func @transform_5(%arg0: i32) -> (i32, i32) {
    %c0_i32 = arith.constant 0 : i32
    %c0_i32_0 = arith.constant 0 : i32
    return %c0_i32, %arg0 : i32, i32
  }
}

module attributes {stable_mosaic.version = 11 : i64} {
  func.func @_hidden_kernel(%arg0: i32, %arg1: memref<8x384xbf16, #tpu.memory_space<vmem>>, %arg2: memref<8x384xbf16, #tpu.memory_space<vmem>>, %arg3: memref<2x8x8xf32, #tpu.memory_space<vmem>>, %arg4: memref<8x3xf32, #tpu.memory_space<vmem>>, %arg5: memref<8x384xbf16, #tpu.memory_space<vmem>>) attributes {dimension_semantics = [#tpu.dimension_semantics<parallel>], iteration_bounds = array<i64: 2>, scalar_prefetch = 0 : i64, scratch_operands = 0 : i64, tpu.core_type = #tpu.core_type<tc>, window_params = [{transform_indices = @transform_0, window_bounds = array<i64: 8, 384>}, {transform_indices = @transform_1, window_bounds = array<i64: 8, 384>}, {pipeline_mode = #tpu.pipeline_mode<synchronous>, transform_indices = @transform_2, window_bounds = array<i64: 2, 8, 8>}, {pipeline_mode = #tpu.pipeline_mode<synchronous>, transform_indices = @transform_3, window_bounds = array<i64: 8, 3>}, {transform_indices = @transform_4, window_bounds = array<i64: 8, 384>}]} {
    %c0 = arith.constant 0 : index
    %c0_0 = arith.constant 0 : index
    %0 = vector.load %arg1[%c0, %c0_0] : memref<8x384xbf16, #tpu.memory_space<vmem>>, vector<8x384xbf16>
    %1 = arith.extf %0 : vector<8x384xbf16> to vector<8x384xf32>
    %c0_1 = arith.constant 0 : index
    %c0_2 = arith.constant 0 : index
    %2 = vector.load %arg2[%c0_1, %c0_2] : memref<8x384xbf16, #tpu.memory_space<vmem>>, vector<8x384xbf16>
    %3 = arith.extf %2 : vector<8x384xbf16> to vector<8x384xf32>
    %c0_3 = arith.constant 0 : index
    %c0_4 = arith.constant 0 : index
    %c0_5 = arith.constant 0 : index
    %4 = vector.load %arg3[%c0_3, %c0_4, %c0_5] : memref<2x8x8xf32, #tpu.memory_space<vmem>>, vector<1x8x8xf32>
    %5 = vector.shape_cast %4 : vector<1x8x8xf32> to vector<8x8xf32>
    %cst = arith.constant dense<0.000000e+00> : vector<8x384xf32>
    %6 = tpu.matmul %5, %1, %cst {dimension_numbers = #tpu.dot_dimension_numbers<[1], [0], [0], [1], [0, 0, 1, 1], [], []>} : vector<8x8xf32>, vector<8x384xf32>, vector<8x384xf32> -> vector<8x384xf32>
    %c1 = arith.constant 1 : index
    %c0_6 = arith.constant 0 : index
    %c0_7 = arith.constant 0 : index
    %7 = vector.load %arg3[%c1, %c0_6, %c0_7] : memref<2x8x8xf32, #tpu.memory_space<vmem>>, vector<1x8x8xf32>
    %8 = vector.shape_cast %7 : vector<1x8x8xf32> to vector<8x8xf32>
    %cst_8 = arith.constant dense<0.000000e+00> : vector<8x384xf32>
    %9 = tpu.matmul %8, %3, %cst_8 {dimension_numbers = #tpu.dot_dimension_numbers<[1], [0], [0], [1], [0, 0, 1, 1], [], []>} : vector<8x8xf32>, vector<8x384xf32>, vector<8x384xf32> -> vector<8x384xf32>
    %10 = arith.addf %6, %9 : vector<8x384xf32>
    %c0_9 = arith.constant 0 : index
    %c0_10 = arith.constant 0 : index
    %11 = vector.load %arg4[%c0_9, %c0_10] : memref<8x3xf32, #tpu.memory_space<vmem>>, vector<8x3xf32>
    %12 = vector.extract_strided_slice %11 {offsets = [0, 0], sizes = [8, 1], strides = [1, 1]} : vector<8x3xf32> to vector<8x1xf32>
    %13 = vector.broadcast %12 : vector<8x1xf32> to vector<8x384xf32>
    %14 = arith.addf %10, %13 : vector<8x384xf32>
    %15 = vector.extract_strided_slice %11 {offsets = [0, 1], sizes = [8, 1], strides = [1, 1]} : vector<8x3xf32> to vector<8x1xf32>
    %16 = vector.extract_strided_slice %11 {offsets = [0, 2], sizes = [8, 1], strides = [1, 1]} : vector<8x3xf32> to vector<8x1xf32>
    %cst_11 = arith.constant dense<0.000000e+00> : vector<384xf32>
    %17 = vector.multi_reduction <add>, %14, %cst_11 [0] : vector<8x384xf32> to vector<384xf32>
    %18 = vector.shape_cast %17 : vector<384xf32> to vector<1x384xf32>
    %cst_12 = arith.constant 8.000000e+00 : f32
    %19 = vector.broadcast %cst_12 : f32 to vector<1x384xf32>
    %20 = arith.divf %18, %19 : vector<1x384xf32>
    %21 = vector.broadcast %20 : vector<1x384xf32> to vector<8x384xf32>
    %22 = arith.subf %14, %21 : vector<8x384xf32>
    %23 = arith.mulf %22, %22 : vector<8x384xf32>
    %cst_13 = arith.constant dense<0.000000e+00> : vector<384xf32>
    %24 = vector.multi_reduction <add>, %23, %cst_13 [0] : vector<8x384xf32> to vector<384xf32>
    %25 = vector.shape_cast %24 : vector<384xf32> to vector<1x384xf32>
    %cst_14 = arith.constant 8.000000e+00 : f32
    %26 = vector.broadcast %cst_14 : f32 to vector<1x384xf32>
    %27 = arith.divf %25, %26 : vector<1x384xf32>
    %28 = vector.broadcast %20 : vector<1x384xf32> to vector<8x384xf32>
    %29 = arith.subf %14, %28 : vector<8x384xf32>
    %cst_15 = arith.constant 9.99999974E-6 : f32
    %30 = vector.broadcast %cst_15 : f32 to vector<1x384xf32>
    %31 = arith.addf %27, %30 : vector<1x384xf32>
    %32 = math.rsqrt %31 : vector<1x384xf32>
    %33 = vector.broadcast %32 : vector<1x384xf32> to vector<8x384xf32>
    %34 = arith.mulf %29, %33 : vector<8x384xf32>
    %35 = vector.broadcast %15 : vector<8x1xf32> to vector<8x384xf32>
    %36 = arith.mulf %34, %35 : vector<8x384xf32>
    %37 = vector.broadcast %16 : vector<8x1xf32> to vector<8x384xf32>
    %38 = arith.addf %36, %37 : vector<8x384xf32>
    %cst_16 = arith.constant 0.000000e+00 : f32
    %39 = vector.broadcast %cst_16 : f32 to vector<8x384xf32>
    %40 = arith.maximumf %38, %39 : vector<8x384xf32>
    %41 = arith.truncf %40 : vector<8x384xf32> to vector<8x384xbf16>
    %c0_17 = arith.constant 0 : index
    %c0_18 = arith.constant 0 : index
    %42 = vector.load %arg5[%c0_17, %c0_18] : memref<8x384xbf16, #tpu.memory_space<vmem>>, vector<8x384xbf16>
    tpu.vector_store %arg5[%c0_17, %c0_18], %41 {strides = array<i32>} : memref<8x384xbf16, #tpu.memory_space<vmem>>, vector<8x384xbf16>,
    return
  }
  func.func @transform_0(%arg0: i32) -> (i32, i32) {
    %c0_i32 = arith.constant 0 : i32
    %c0_i32_0 = arith.constant 0 : i32
    return %c0_i32, %arg0 : i32, i32
  }
  func.func @transform_1(%arg0: i32) -> (i32, i32) {
    %c0_i32 = arith.constant 0 : i32
    %c0_i32_0 = arith.constant 0 : i32
    return %c0_i32, %arg0 : i32, i32
  }
  func.func @transform_2(%arg0: i32) -> (i32, i32, i32) {
    %c0_i32 = arith.constant 0 : i32
    %c0_i32_0 = arith.constant 0 : i32
    %c0_i32_1 = arith.constant 0 : i32
    %c0_i32_2 = arith.constant 0 : i32
    return %c0_i32, %c0_i32_0, %c0_i32_1 : i32, i32, i32
  }
  func.func @transform_3(%arg0: i32) -> (i32, i32) {
    %c0_i32 = arith.constant 0 : i32
    %c0_i32_0 = arith.constant 0 : i32
    %c0_i32_1 = arith.constant 0 : i32
    return %c0_i32, %c0_i32_0 : i32, i32
  }
  func.func @transform_4(%arg0: i32) -> (i32, i32) {
    %c0_i32 = arith.constant 0 : i32
    %c0_i32_0 = arith.constant 0 : i32
    return %c0_i32, %arg0 : i32, i32
  }
}

module attributes {stable_mosaic.version = 11 : i64} {
  func.func @_hidden_residual_kernel(%arg0: i32, %arg1: memref<8x384xbf16, #tpu.memory_space<vmem>>, %arg2: memref<8x384xbf16, #tpu.memory_space<vmem>>, %arg3: memref<8x384xbf16, #tpu.memory_space<vmem>>, %arg4: memref<2x8x8xf32, #tpu.memory_space<vmem>>, %arg5: memref<8x3xf32, #tpu.memory_space<vmem>>, %arg6: memref<8x384xf32, #tpu.memory_space<vmem>>) attributes {dimension_semantics = [#tpu.dimension_semantics<parallel>], iteration_bounds = array<i64: 2>, scalar_prefetch = 0 : i64, scratch_operands = 0 : i64, tpu.core_type = #tpu.core_type<tc>, window_params = [{transform_indices = @transform_0, window_bounds = array<i64: 8, 384>}, {transform_indices = @transform_1, window_bounds = array<i64: 8, 384>}, {transform_indices = @transform_2, window_bounds = array<i64: 8, 384>}, {pipeline_mode = #tpu.pipeline_mode<synchronous>, transform_indices = @transform_3, window_bounds = array<i64: 2, 8, 8>}, {pipeline_mode = #tpu.pipeline_mode<synchronous>, transform_indices = @transform_4, window_bounds = array<i64: 8, 3>}, {transform_indices = @transform_5, window_bounds = array<i64: 8, 384>}]} {
    %c0 = arith.constant 0 : index
    %c0_0 = arith.constant 0 : index
    %0 = vector.load %arg1[%c0, %c0_0] : memref<8x384xbf16, #tpu.memory_space<vmem>>, vector<8x384xbf16>
    %1 = arith.extf %0 : vector<8x384xbf16> to vector<8x384xf32>
    %c0_1 = arith.constant 0 : index
    %c0_2 = arith.constant 0 : index
    %2 = vector.load %arg2[%c0_1, %c0_2] : memref<8x384xbf16, #tpu.memory_space<vmem>>, vector<8x384xbf16>
    %3 = arith.extf %2 : vector<8x384xbf16> to vector<8x384xf32>
    %c0_3 = arith.constant 0 : index
    %c0_4 = arith.constant 0 : index
    %c0_5 = arith.constant 0 : index
    %4 = vector.load %arg4[%c0_3, %c0_4, %c0_5] : memref<2x8x8xf32, #tpu.memory_space<vmem>>, vector<1x8x8xf32>
    %5 = vector.shape_cast %4 : vector<1x8x8xf32> to vector<8x8xf32>
    %cst = arith.constant dense<0.000000e+00> : vector<8x384xf32>
    %6 = tpu.matmul %5, %1, %cst {dimension_numbers = #tpu.dot_dimension_numbers<[1], [0], [0], [1], [0, 0, 1, 1], [], []>} : vector<8x8xf32>, vector<8x384xf32>, vector<8x384xf32> -> vector<8x384xf32>
    %c1 = arith.constant 1 : index
    %c0_6 = arith.constant 0 : index
    %c0_7 = arith.constant 0 : index
    %7 = vector.load %arg4[%c1, %c0_6, %c0_7] : memref<2x8x8xf32, #tpu.memory_space<vmem>>, vector<1x8x8xf32>
    %8 = vector.shape_cast %7 : vector<1x8x8xf32> to vector<8x8xf32>
    %cst_8 = arith.constant dense<0.000000e+00> : vector<8x384xf32>
    %9 = tpu.matmul %8, %3, %cst_8 {dimension_numbers = #tpu.dot_dimension_numbers<[1], [0], [0], [1], [0, 0, 1, 1], [], []>} : vector<8x8xf32>, vector<8x384xf32>, vector<8x384xf32> -> vector<8x384xf32>
    %10 = arith.addf %6, %9 : vector<8x384xf32>
    %c0_9 = arith.constant 0 : index
    %c0_10 = arith.constant 0 : index
    %11 = vector.load %arg5[%c0_9, %c0_10] : memref<8x3xf32, #tpu.memory_space<vmem>>, vector<8x3xf32>
    %12 = vector.extract_strided_slice %11 {offsets = [0, 0], sizes = [8, 1], strides = [1, 1]} : vector<8x3xf32> to vector<8x1xf32>
    %13 = vector.broadcast %12 : vector<8x1xf32> to vector<8x384xf32>
    %14 = arith.addf %10, %13 : vector<8x384xf32>
    %15 = vector.extract_strided_slice %11 {offsets = [0, 1], sizes = [8, 1], strides = [1, 1]} : vector<8x3xf32> to vector<8x1xf32>
    %16 = vector.extract_strided_slice %11 {offsets = [0, 2], sizes = [8, 1], strides = [1, 1]} : vector<8x3xf32> to vector<8x1xf32>
    %cst_11 = arith.constant dense<0.000000e+00> : vector<384xf32>
    %17 = vector.multi_reduction <add>, %14, %cst_11 [0] : vector<8x384xf32> to vector<384xf32>
    %18 = vector.shape_cast %17 : vector<384xf32> to vector<1x384xf32>
    %cst_12 = arith.constant 8.000000e+00 : f32
    %19 = vector.broadcast %cst_12 : f32 to vector<1x384xf32>
    %20 = arith.divf %18, %19 : vector<1x384xf32>
    %21 = vector.broadcast %20 : vector<1x384xf32> to vector<8x384xf32>
    %22 = arith.subf %14, %21 : vector<8x384xf32>
    %23 = arith.mulf %22, %22 : vector<8x384xf32>
    %cst_13 = arith.constant dense<0.000000e+00> : vector<384xf32>
    %24 = vector.multi_reduction <add>, %23, %cst_13 [0] : vector<8x384xf32> to vector<384xf32>
    %25 = vector.shape_cast %24 : vector<384xf32> to vector<1x384xf32>
    %cst_14 = arith.constant 8.000000e+00 : f32
    %26 = vector.broadcast %cst_14 : f32 to vector<1x384xf32>
    %27 = arith.divf %25, %26 : vector<1x384xf32>
    %28 = vector.broadcast %20 : vector<1x384xf32> to vector<8x384xf32>
    %29 = arith.subf %14, %28 : vector<8x384xf32>
    %cst_15 = arith.constant 9.99999974E-6 : f32
    %30 = vector.broadcast %cst_15 : f32 to vector<1x384xf32>
    %31 = arith.addf %27, %30 : vector<1x384xf32>
    %32 = math.rsqrt %31 : vector<1x384xf32>
    %33 = vector.broadcast %32 : vector<1x384xf32> to vector<8x384xf32>
    %34 = arith.mulf %29, %33 : vector<8x384xf32>
    %35 = vector.broadcast %15 : vector<8x1xf32> to vector<8x384xf32>
    %36 = arith.mulf %34, %35 : vector<8x384xf32>
    %37 = vector.broadcast %16 : vector<8x1xf32> to vector<8x384xf32>
    %38 = arith.addf %36, %37 : vector<8x384xf32>
    %cst_16 = arith.constant 0.000000e+00 : f32
    %39 = vector.broadcast %cst_16 : f32 to vector<8x384xf32>
    %40 = arith.maximumf %38, %39 : vector<8x384xf32>
    %c0_17 = arith.constant 0 : index
    %c0_18 = arith.constant 0 : index
    %41 = vector.load %arg3[%c0_17, %c0_18] : memref<8x384xbf16, #tpu.memory_space<vmem>>, vector<8x384xbf16>
    %42 = arith.extf %41 : vector<8x384xbf16> to vector<8x384xf32>
    %43 = arith.addf %40, %42 : vector<8x384xf32>
    %c0_19 = arith.constant 0 : index
    %c0_20 = arith.constant 0 : index
    %44 = vector.load %arg6[%c0_19, %c0_20] : memref<8x384xf32, #tpu.memory_space<vmem>>, vector<8x384xf32>
    tpu.vector_store %arg6[%c0_19, %c0_20], %43 {strides = array<i32>} : memref<8x384xf32, #tpu.memory_space<vmem>>, vector<8x384xf32>,
    return
  }
  func.func @transform_0(%arg0: i32) -> (i32, i32) {
    %c0_i32 = arith.constant 0 : i32
    %c0_i32_0 = arith.constant 0 : i32
    return %c0_i32, %arg0 : i32, i32
  }
  func.func @transform_1(%arg0: i32) -> (i32, i32) {
    %c0_i32 = arith.constant 0 : i32
    %c0_i32_0 = arith.constant 0 : i32
    return %c0_i32, %arg0 : i32, i32
  }
  func.func @transform_2(%arg0: i32) -> (i32, i32) {
    %c0_i32 = arith.constant 0 : i32
    %c0_i32_0 = arith.constant 0 : i32
    return %c0_i32, %arg0 : i32, i32
  }
  func.func @transform_3(%arg0: i32) -> (i32, i32, i32) {
    %c0_i32 = arith.constant 0 : i32
    %c0_i32_0 = arith.constant 0 : i32
    %c0_i32_1 = arith.constant 0 : i32
    %c0_i32_2 = arith.constant 0 : i32
    return %c0_i32, %c0_i32_0, %c0_i32_1 : i32, i32, i32
  }
  func.func @transform_4(%arg0: i32) -> (i32, i32) {
    %c0_i32 = arith.constant 0 : i32
    %c0_i32_0 = arith.constant 0 : i32
    %c0_i32_1 = arith.constant 0 : i32
    return %c0_i32, %c0_i32_0 : i32, i32
  }
  func.func @transform_5(%arg0: i32) -> (i32, i32) {
    %c0_i32 = arith.constant 0 : i32
    %c0_i32_0 = arith.constant 0 : i32
    return %c0_i32, %arg0 : i32, i32
  }
}

</mosaic_0001>

<llo_original>
// kernel: _forward_device.3
$region0: #{_forward_device.3}
  #allocation0 [shape = 'u32[]', space=smem, size = 0x4, offset = 0x4, fixed_abs, tag = 'smem constant byte address 0x4 - core index']
  #allocation1 [shape = 'u32[72,128]{1,0:T(1,128)}', space=vmem, size = 0x9000, scoped, tag = 'internal scratch']
  %s0 = inlined_call_operand.vmem [shape: f32[1,768], index: 0, kind: input, shape index: {}]
  %s1 = inlined_call_operand.vmem [shape: f32[1,768], index: 1, kind: input, shape index: {}]
  %s2 = inlined_call_operand.vmem [shape: f32[8,4], index: 2, kind: input, shape index: {}]
  %s3 = inlined_call_operand.vmem [shape: f32[8,4], index: 3, kind: input, shape index: {}]
  %s4 = inlined_call_operand.vmem [shape: bf16[8,768], index: 4, kind: output, shape index: {0}]
  %s5 = inlined_call_operand.vmem [shape: bf16[8,768], index: 5, kind: output, shape index: {1}]
  %6 = xla_tuple %s4, %s5
  %s7 = sld [smem:[#allocation0]]
  $region57: #{_forward_device.3} parent=0
    _
  %s9 = ssub.s32 1, %s7
  %s10 = scalar_select 0, %s9, %s7
  loop: start=0, step=1, limit=4
  $region2: #{_forward_device.3} parent=0 // loop_pre_header
    _
  $region3: #{_forward_device.3} parent=0 // loop_header
    %s12 = sphi 0, %s16
    %p13 = scmp.ge.s32.totalorder %s12, 4
    %s22 = sphi 0, %s24
    %s25 = sphi 0, %s22
    %s26 = sphi 0, %s25
    %s42 = sphi 0, %s26
    %s48 = sphi 0, %s50
    %s51 = sphi 0, %s48
    %s52 = sphi 0, %s51
    %s68 = sphi 0, %s52
    %s72 = sphi 0, %s72
    %s74 = sphi 0, %s72
    %s75 = sphi 0, %s74
    %s89 = sphi 0, %s75
    %s93 = sphi 0, %s93
    %s95 = sphi 0, %s93
    %s96 = sphi 0, %s95
    %s110 = sphi 0, %s96
    %s116 = sphi 0, %s118
    %s119 = sphi 0, %s116
    %s120 = sphi 0, %s119
    %s136 = sphi 0, %s120
    %s142 = sphi 0, %s144
    %s145 = sphi 0, %s142
    %s146 = sphi 0, %s145
    %s162 = sphi 0, %s146
  $region4: #{_forward_device.3} parent=0 // loop_header_branch
    %15 = sbr.rel (%p13) target = $region8
  $region5: #{_forward_device.3} parent=0 // loop_body
    %s17 = ssub.s32 %s12, 1
    %s18 = ssub.s32 %s12, 2
    %s19 = sadd.s32 %s12, 1
    %s20 = ssub.s32 %s12, %s19
    %p21 = scmp.eq.s32.totalorder %s20, 0
    %s23 = sadd.s32 %s22, 1
    %s24 = scalar_select %p21, %s22, %s23
    %p27 = pneg %p21
    %p28 = scmp.eq.s32.totalorder %s12, 1
    %p29 = por %p27, %p28
    %p30 = scmp.ne.s32.totalorder %s22, %s25
    %p31 = scmp.eq.s32.totalorder %s12, 0
    %p32 = por %p30, %p31
    %p33 = scmp.ne.s32.totalorder %s22, %s25
    %p34 = scmp.eq.s32.totalorder %s17, 1
    %p35 = por %p33, %p34
    %p36 = scmp.ne.s32.totalorder %s25, %s26
    %p37 = scmp.eq.s32.totalorder %s17, 0
    %p38 = por %p36, %p37
    %p39 = scmp.ne.s32.totalorder %s25, %s26
    %p40 = scmp.eq.s32.totalorder %s18, 1
    %p41 = por %p39, %p40
    %p43 = scmp.ne.s32.totalorder %s26, %s42
    %p44 = scmp.eq.s32.totalorder %s18, 0
    %p45 = por %p43, %p44
    %s46 = ssub.s32 %s12, %s19
    %p47 = scmp.eq.s32.totalorder %s46, 0
    %s49 = sadd.s32 %s48, 1
    %s50 = scalar_select %p47, %s48, %s49
    %p53 = pneg %p47
    %p54 = scmp.eq.s32.totalorder %s12, 1
    %p55 = por %p53, %p54
    %p56 = scmp.ne.s32.totalorder %s48, %s51
    %p57 = scmp.eq.s32.totalorder %s12, 0
    %p58 = por %p56, %p57
    %p59 = scmp.ne.s32.totalorder %s48, %s51
    %p60 = scmp.eq.s32.totalorder %s17, 1
    %p61 = por %p59, %p60
    %p62 = scmp.ne.s32.totalorder %s51, %s52
    %p63 = scmp.eq.s32.totalorder %s17, 0
    %p64 = por %p62, %p63
    %p65 = scmp.ne.s32.totalorder %s51, %s52
    %p66 = scmp.eq.s32.totalorder %s18, 1
    %p67 = por %p65, %p66
    %p69 = scmp.ne.s32.totalorder %s52, %s68
    %p70 = scmp.eq.s32.totalorder %s18, 0
    %p71 = por %p69, %p70
    %s73 = sadd.s32 %s72, 1
    %p76 = scmp.eq.s32.totalorder %s12, 1
    %p77 = scmp.ne.s32.totalorder %s72, %s74
    %p78 = scmp.eq.s32.totalorder %s12, 0
    %p79 = por %p77, %p78
    %p80 = scmp.ne.s32.totalorder %s72, %s74
    %p81 = scmp.eq.s32.totalorder %s17, 1
    %p82 = por %p80, %p81
    %p83 = scmp.ne.s32.totalorder %s74, %s75
    %p84 = scmp.eq.s32.totalorder %s17, 0
    %p85 = por %p83, %p84
    %p86 = scmp.ne.s32.totalorder %s74, %s75
    %p87 = scmp.eq.s32.totalorder %s18, 1
    %p88 = por %p86, %p87
    %p90 = scmp.ne.s32.totalorder %s75, %s89
    %p91 = scmp.eq.s32.totalorder %s18, 0
    %p92 = por %p90, %p91
    %s94 = sadd.s32 %s93, 1
    %p97 = scmp.eq.s32.totalorder %s12, 1
    %p98 = scmp.ne.s32.totalorder %s93, %s95
    %p99 = scmp.eq.s32.totalorder %s12, 0
    %p100 = por %p98, %p99
    %p101 = scmp.ne.s32.totalorder %s93, %s95
    %p102 = scmp.eq.s32.totalorder %s17, 1
    %p103 = por %p101, %p102
    %p104 = scmp.ne.s32.totalorder %s95, %s96
    %p105 = scmp.eq.s32.totalorder %s17, 0
    %p106 = por %p104, %p105
    %p107 = scmp.ne.s32.totalorder %s95, %s96
    %p108 = scmp.eq.s32.totalorder %s18, 1
    %p109 = por %p107, %p108
    %p111 = scmp.ne.s32.totalorder %s96, %s110
    %p112 = scmp.eq.s32.totalorder %s18, 0
    %p113 = por %p111, %p112
    %s114 = ssub.s32 %s12, %s19
    %p115 = scmp.eq.s32.totalorder %s114, 0
    %s117 = sadd.s32 %s116, 1
    %s118 = scalar_select %p115, %s116, %s117
    %p121 = pneg %p115
    %p122 = scmp.eq.s32.totalorder %s12, 1
    %p123 = por %p121, %p122
    %p124 = scmp.ne.s32.totalorder %s116, %s119
    %p125 = scmp.eq.s32.totalorder %s12, 0
    %p126 = por %p124, %p125
    %p127 = scmp.ne.s32.totalorder %s116, %s119
    %p128 = scmp.eq.s32.totalorder %s17, 1
    %p129 = por %p127, %p128
    %p130 = scmp.ne.s32.totalorder %s119, %s120
    %p131 = scmp.eq.s32.totalorder %s17, 0
    %p132 = por %p130, %p131
    %p133 = scmp.ne.s32.totalorder %s119, %s120
    %p134 = scmp.eq.s32.totalorder %s18, 1
    %p135 = por %p133, %p134
    %p137 = scmp.ne.s32.totalorder %s120, %s136
    %p138 = scmp.eq.s32.totalorder %s18, 0
    %p139 = por %p137, %p138
    %s140 = ssub.s32 %s12, %s19
    %p141 = scmp.eq.s32.totalorder %s140, 0
    %s143 = sadd.s32 %s142, 1
    %s144 = scalar_select %p141, %s142, %s143
    %p147 = pneg %p141
    %p148 = scmp.eq.s32.totalorder %s12, 1
    %p149 = por %p147, %p148
    %p150 = scmp.ne.s32.totalorder %s142, %s145
    %p151 = scmp.eq.s32.totalorder %s12, 0
    %p152 = por %p150, %p151
    %p153 = scmp.ne.s32.totalorder %s142, %s145
    %p154 = scmp.eq.s32.totalorder %s17, 1
    %p155 = por %p153, %p154
    %p156 = scmp.ne.s32.totalorder %s145, %s146
    %p157 = scmp.eq.s32.totalorder %s17, 0
    %p158 = por %p156, %p157
    %p159 = scmp.ne.s32.totalorder %s145, %s146
    %p160 = scmp.eq.s32.totalorder %s18, 1
    %p161 = por %p159, %p160
    %p163 = scmp.ne.s32.totalorder %s146, %s162
    %p164 = scmp.eq.s32.totalorder %s18, 0
    %p165 = por %p163, %p164
    %p166 = scmp.le.s32.totalorder 1, %s12
    %p167 = scmp.lt.s32.totalorder %s12, 3
    %p168 = pnand %p166, %p167
    %p169 = pneg %p168
    // Predicated region
    $region9: #{_forward_device.3} parent=5 // pred_check
      _
    $region10: #{_forward_device.3} parent=5 // pred_check_branch
      %171 = sbr.rel (%p168) target = $region12
    $region11: #{_forward_device.3} parent=5 // pred_region
      %s172 = ssub.s32 %s12, 1
      // Predicated region
      $region13: #{_forward_device.3} parent=11 // pred_check
        %p173 = pneg %p85
      $region14: #{_forward_device.3} parent=11 // pred_check_branch
        %175 = sbr.rel (%p173) target = $region16
      $region15: #{_forward_device.3} parent=11 // pred_region
        _
      $region16: #{_forward_device.3} parent=11 // pred_fallthru
        _
      // Predicated region
      $region17: #{_forward_device.3} parent=11 // pred_check
        %p176 = pneg %p106
      $region18: #{_forward_device.3} parent=11 // pred_check_branch
        %178 = sbr.rel (%p176) target = $region20
      $region19: #{_forward_device.3} parent=11 // pred_region
        _
      $region20: #{_forward_device.3} parent=11 // pred_fallthru
        _
    $region12: #{_forward_device.3} parent=5 // pred_fallthru
      _
    %p179 = scmp.lt.s32.totalorder %s12, 2
    // Predicated region
    $region21: #{_forward_device.3} parent=5 // pred_check
      %p180 = pneg %p179
    $region22: #{_forward_device.3} parent=5 // pred_check_branch
      %182 = sbr.rel (%p180) target = $region24
    $region23: #{_forward_device.3} parent=5 // pred_region
      // Predicated region
      $region25: #{_forward_device.3} parent=23 // pred_check
        %p183 = pneg %p32
      $region26: #{_forward_device.3} parent=23 // pred_check_branch
        %185 = sbr.rel (%p183) target = $region28
      $region27: #{_forward_device.3} parent=23 // pred_region
        %s186 = smul.u32 3, %s12
        %p187 = scmp.lt.s32.totalorder %s186, 5
        %s188 = scalar_select %p187, %s186, 5
        %s189 = scalar_lea.vmem %s0, %s188
        %s190 = smul.u32 3, %s12
      $region28: #{_forward_device.3} parent=23 // pred_fallthru
        _
      // Predicated region
      $region29: #{_forward_device.3} parent=23 // pred_check
        %p191 = pneg %p58
      $region30: #{_forward_device.3} parent=23 // pred_check_branch
        %193 = sbr.rel (%p191) target = $region32
      $region31: #{_forward_device.3} parent=23 // pred_region
        %s194 = smul.u32 3, %s12
        %p195 = scmp.lt.s32.totalorder %s194, 5
        %s196 = scalar_select %p195, %s194, 5
        %s197 = scalar_lea.vmem %s1, %s196
        %s198 = smul.u32 3, %s12
      $region32: #{_forward_device.3} parent=23 // pred_fallthru
        _
    $region24: #{_forward_device.3} parent=5 // pred_fallthru
      _
    %p199 = scmp.le.s32.totalorder 1, %s12
    %p200 = scmp.lt.s32.totalorder %s12, 3
    %p201 = pnand %p199, %p200
    %p202 = pneg %p201
    // Predicated region
    $region33: #{_forward_device.3} parent=5 // pred_check
      _
    $region34: #{_forward_device.3} parent=5 // pred_check_branch
      %204 = sbr.rel (%p201) target = $region36
    $region35: #{_forward_device.3} parent=5 // pred_region
      %s205 = ssub.s32 %s12, 1
      %s206 = smul.u32 3, %s17
      %p207 = scmp.lt.s32.totalorder %s206, 5
      %s208 = scalar_select %p207, %s206, 5
      %s209 = scalar_lea.vmem %s0, %s208
      %p210 = pneg %p38
      %p211 = pneg %p35
      %s212 = smul.u32 3, %s17
      %p213 = scmp.lt.s32.totalorder %s212, 5
      %s214 = scalar_select %p213, %s212, 5
      %s215 = scalar_lea.vmem %s1, %s214
      %p216 = pneg %p64
      %p217 = pneg %p61
      %p218 = pneg %p85
      %p219 = pneg %p82
      %p220 = pneg %p106
      %p221 = pneg %p103
      %p222 = pneg %p132
      %p223 = pneg %p129
      %s224 = smul.u32 3, %s17
      %p225 = scmp.lt.s32.totalorder %s224, 5
      %s226 = scalar_select %p225, %s224, 5
      %s227 = smul.addr %s226, 4
      %s228 = scalar_lea.vmem %s4, %s227
      %p229 = pneg %p158
      %p230 = pneg %p155
      %s231 = smul.u32 3, %s17
      %p232 = scmp.lt.s32.totalorder %s231, 5
      %s233 = scalar_select %p232, %s231, 5
      %s234 = smul.addr %s233, 4
      %s235 = scalar_lea.vmem %s5, %s234
      %s236 = smul.u32 3, %s17
      %p237 = scmp.lt.s32.totalorder %s236, 5
      %s238 = scalar_select %p237, %s236, 5
      %s239 = scalar_lea.vmem %s0, %s238
      %s240 = smul.u32 3, %s17
      %s241 = smul.u32 3, %s17
      %p242 = scmp.lt.s32.totalorder %s241, 5
      %s243 = scalar_select %p242, %s241, 5
      %s244 = scalar_lea.vmem %s1, %s243
      %s245 = smul.u32 3, %s17
      %s246 = smul.u32 3, %s17
      %p247 = scmp.lt.s32.totalorder %s246, 5
      %s248 = scalar_select %p247, %s246, 5
      %s249 = smul.addr %s248, 4
      %s250 = scalar_lea.vmem %s4, %s249
      %s251 = smul.u32 3, %s17
      %s252 = smul.u32 3, %s17
      %p253 = scmp.lt.s32.totalorder %s252, 5
      %s254 = scalar_select %p253, %s252, 5
      %s255 = smul.addr %s254, 4
      %s256 = scalar_lea.vmem %s5, %s255
      %s257 = smul.u32 3, %s17
      %v258 = vld [vmem:[%s239] sm:$0x7]
      %v259 = vld [vmem:[%s244] sm:$0x7]
      %v260 = vld [vmem:[%s2] sm:$0xff]
      %v261 = vld [vmem:[%s3] sm:$0xff]
      %263 = vset.pattern.permute.xlu0 0
      %264 = vperm.xlu0 %263, %v260
      %v265 = vpop.permute.xlu0 %264
      %v268 = vperm.slane %v258, 0
      %v269 = vperm.slane %v258, 1
      %v270 = vperm.slane %v258, 2
      %v274 = vmul.f32 %v265, %v268
      %v275 = vmul.f32 %v265, %v269
      %v276 = vmul.f32 %v265, %v270
      %277 = vset.pattern.permute.xlu0 1
      %278 = vperm.xlu0 %277, %v260
      %v279 = vpop.permute.xlu0 %278
      %v282 = vperm.slane %v259, 0
      %v283 = vperm.slane %v259, 1
      %v284 = vperm.slane %v259, 2
      %v288 = vmul.f32 %v279, %v282
      %v289 = vmul.f32 %v279, %v283
      %v290 = vmul.f32 %v279, %v284
      %v291 = vadd.f32 %v274, %v288
      %v292 = vadd.f32 %v275, %v289
      %v293 = vadd.f32 %v276, %v290
      %295 = vset.pattern.permute.xlu0 0
      %296 = vperm.xlu0 %295, %v261
      %v297 = vpop.permute.xlu0 %296
      %v299 = vadd.f32 %v291, %v297
      %v300 = vadd.f32 %v292, %v297
      %v301 = vadd.f32 %v293, %v297
      %v302 = vpack.c.bf16 %v300, %v299
      %v303 = vpack.c.bf16 %v301, %v301
      %304 = vst [vmem:[%s256] sm:$0xff] %v302
      %305 = vst [vmem:[%s256 + $0x8] sm:$0xf] %v303
      %306 = vset.pattern.permute.xlu0 2
      %307 = vperm.xlu0 %306, %v260
      %v308 = vpop.permute.xlu0 %307
      %v310 = vmul.f32 %v308, %v268
      %v311 = vmul.f32 %v308, %v269
      %v312 = vmul.f32 %v308, %v270
      %313 = vset.pattern.permute.xlu0 3
      %314 = vperm.xlu0 %313, %v260
      %v315 = vpop.permute.xlu0 %314
      %v317 = vmul.f32 %v315, %v282
      %v318 = vmul.f32 %v315, %v283
      %v319 = vmul.f32 %v315, %v284
      %v320 = vadd.f32 %v310, %v317
      %v321 = vadd.f32 %v311, %v318
      %v322 = vadd.f32 %v312, %v319
      %323 = vset.pattern.permute.xlu0 1
      %324 = vperm.xlu0 %323, %v261
      %v325 = vpop.permute.xlu0 %324
      %v327 = vadd.f32 %v320, %v325
      %v328 = vadd.f32 %v321, %v325
      %v329 = vadd.f32 %v322, %v325
      %v330 = vrot.slane %v327, 4
      %v331 = vadd.f32 %v327, %v330
      %v332 = vrot.slane %v331, 2
      %v333 = vadd.f32 %v331, %v332
      %v334 = vrot.slane %v333, 1
      %v335 = vadd.f32 %v333, %v334
      %v336 = vrot.slane %v328, 4
      %v337 = vadd.f32 %v328, %v336
      %v338 = vrot.slane %v337, 2
      %v339 = vadd.f32 %v337, %v338
      %v340 = vrot.slane %v339, 1
      %v341 = vadd.f32 %v339, %v340
      %v342 = vrot.slane %v329, 4
      %v343 = vadd.f32 %v329, %v342
      %v344 = vrot.slane %v343, 2
      %v345 = vadd.f32 %v343, %v344
      %v346 = vrot.slane %v345, 1
      %v347 = vadd.f32 %v345, %v346
      %v348 = vrcp.pop 8.0
      %v349 = vmul.f32 8.0, %v348
      %v350 = vsub.f32 1.0, %v349
      %v351 = vmul.f32 %v348, %v350
      %v352 = vadd.f32 %v348, %v351
      %vm353 = vweird.f32 %v348
      %v354 = vsel %vm353, %v348, %v352
      %v355 = vmul.f32 %v335, %v354
      %v356 = vmul.f32 %v341, %v354
      %v357 = vmul.f32 %v347, %v354
      %v358 = vsub.f32 %v327, %v355
      %v359 = vsub.f32 %v328, %v356
      %v360 = vsub.f32 %v329, %v357
      %v361 = vmul.f32 %v358, %v358
      %v362 = vmul.f32 %v359, %v359
      %v363 = vmul.f32 %v360, %v360
      %v364 = vrot.slane %v361, 4
      %v365 = vadd.f32 %v361, %v364
      %v366 = vrot.slane %v365, 2
      %v367 = vadd.f32 %v365, %v366
      %v368 = vrot.slane %v367, 1
      %v369 = vadd.f32 %v367, %v368
      %v370 = vrot.slane %v362, 4
      %v371 = vadd.f32 %v362, %v370
      %v372 = vrot.slane %v371, 2
      %v373 = vadd.f32 %v371, %v372
      %v374 = vrot.slane %v373, 1
      %v375 = vadd.f32 %v373, %v374
      %v376 = vrot.slane %v363, 4
      %v377 = vadd.f32 %v363, %v376
      %v378 = vrot.slane %v377, 2
      %v379 = vadd.f32 %v377, %v378
      %v380 = vrot.slane %v379, 1
      %v381 = vadd.f32 %v379, %v380
      %v382 = vmul.f32 %v369, %v354
      %v383 = vmul.f32 %v375, %v354
      %v384 = vmul.f32 %v381, %v354
      %v385 = vadd.f32 %v382, 1e-05
      %v386 = vadd.f32 %v383, 1e-05
      %v387 = vadd.f32 %v384, 1e-05
      %v388 = vrsqrt.pop %v385
      %v389 = vmul.f32 %v388, %v385
      %v390 = vmul.f32 %v389, %v388
      %v391 = vmul.f32 0.5, %v390
      %v392 = vsub.f32 1.5, %v391
      %v393 = vmul.f32 %v388, %v392
      %vm394 = vweird.f32 %v385
      %vm395 = vweird.f32 %v388
      %vm396 = vmor %vm394, %vm395
      %v397 = vsel %vm396, %v388, %v393
      %v398 = vrsqrt.pop %v386
      %v399 = vmul.f32 %v398, %v386
      %v400 = vmul.f32 %v399, %v398
      %v401 = vmul.f32 0.5, %v400
      %v402 = vsub.f32 1.5, %v401
      %v403 = vmul.f32 %v398, %v402
      %vm404 = vweird.f32 %v386
      %vm405 = vweird.f32 %v398
      %vm406 = vmor %vm404, %vm405
      %v407 = vsel %vm406, %v398, %v403
      %v408 = vrsqrt.pop %v387
      %v409 = vmul.f32 %v408, %v387
      %v410 = vmul.f32 %v409, %v408
      %v411 = vmul.f32 0.5, %v410
      %v412 = vsub.f32 1.5, %v411
      %v413 = vmul.f32 %v408, %v412
      %vm414 = vweird.f32 %v387
      %vm415 = vweird.f32 %v408
      %vm416 = vmor %vm414, %vm415
      %v417 = vsel %vm416, %v408, %v413
      %v418 = vmul.f32 %v358, %v397
      %v419 = vmul.f32 %v359, %v407
      %v420 = vmul.f32 %v360, %v417
      %421 = vset.pattern.permute.xlu0 2
      %422 = vperm.xlu0 %421, %v261
      %v423 = vpop.permute.xlu0 %422
      %v425 = vmul.f32 %v418, %v423
      %v426 = vmul.f32 %v419, %v423
      %v427 = vmul.f32 %v420, %v423
      %428 = vset.pattern.permute.xlu0 3
      %429 = vperm.xlu0 %428, %v261
      %v430 = vpop.permute.xlu0 %429
      %v432 = vadd.f32 %v425, %v430
      %v433 = vadd.f32 %v426, %v430
      %v434 = vadd.f32 %v427, %v430
      %v435 = vmax.f32 %v432, 0.0
      %v436 = vmax.f32 %v433, 0.0
      %v437 = vmax.f32 %v434, 0.0
      %v438 = vpack.c.bf16 %v436, %v435
      %v439 = vpack.c.bf16 %v437, %v437
      %440 = vst [vmem:[%s250] sm:$0xff] %v438
      %441 = vst [vmem:[%s250 + $0x8] sm:$0xf] %v439
      %s442 = smul.u32 3, %s17
      %p443 = scmp.lt.s32.totalorder %s442, 5
      %s444 = scalar_select %p443, %s442, 5
      %s445 = smul.addr %s444, 4
      %s446 = scalar_lea.vmem %s4, %s445
      %s447 = smul.u32 3, %s17
      %p448 = scmp.lt.s32.totalorder %s447, 5
      %s449 = scalar_select %p448, %s447, 5
      %s450 = smul.addr %s449, 4
      %s451 = scalar_lea.vmem %s5, %s450
      // Predicated region
      $region37: #{_forward_device.3} parent=35 // pred_check
        %p452 = pneg %p129
      $region38: #{_forward_device.3} parent=35 // pred_check_branch
        %454 = sbr.rel (%p452) target = $region40
      $region39: #{_forward_device.3} parent=35 // pred_region
        %s455 = smul.u32 3, %s17
      $region40: #{_forward_device.3} parent=35 // pred_fallthru
        _
      // Predicated region
      $region41: #{_forward_device.3} parent=35 // pred_check
        %p456 = pneg %p155
      $region42: #{_forward_device.3} parent=35 // pred_check_branch
        %458 = sbr.rel (%p456) target = $region44
      $region43: #{_forward_device.3} parent=35 // pred_region
        %s459 = smul.u32 3, %s17
      $region44: #{_forward_device.3} parent=35 // pred_fallthru
        _
    $region36: #{_forward_device.3} parent=5 // pred_fallthru
      _
    %p460 = scmp.le.s32.totalorder 2, %s12
    // Predicated region
    $region45: #{_forward_device.3} parent=5 // pred_check
      %p461 = pneg %p460
    $region46: #{_forward_device.3} parent=5 // pred_check_branch
      %463 = sbr.rel (%p461) target = $region48
    $region47: #{_forward_device.3} parent=5 // pred_region
      %s464 = ssub.s32 %s12, 2
      // Predicated region
      $region49: #{_forward_device.3} parent=47 // pred_check
        %p465 = pneg %p135
      $region50: #{_forward_device.3} parent=47 // pred_check_branch
        %467 = sbr.rel (%p465) target = $region52
      $region51: #{_forward_device.3} parent=47 // pred_region
        %s468 = smul.u32 3, %s18
        %p469 = scmp.lt.s32.totalorder %s468, 5
        %s470 = scalar_select %p469, %s468, 5
        %s471 = smul.addr %s470, 4
        %s472 = scalar_lea.vmem %s4, %s471
      $region52: #{_forward_device.3} parent=47 // pred_fallthru
        _
      // Predicated region
      $region53: #{_forward_device.3} parent=47 // pred_check
        %p473 = pneg %p161
      $region54: #{_forward_device.3} parent=47 // pred_check_branch
        %475 = sbr.rel (%p473) target = $region56
      $region55: #{_forward_device.3} parent=47 // pred_region
        %s476 = smul.u32 3, %s18
        %p477 = scmp.lt.s32.totalorder %s476, 5
        %s478 = scalar_select %p477, %s476, 5
        %s479 = smul.addr %s478, 4
        %s480 = scalar_lea.vmem %s5, %s479
      $region56: #{_forward_device.3} parent=47 // pred_fallthru
        _
    $region48: #{_forward_device.3} parent=5 // pred_fallthru
      _
  $region6: #{_forward_device.3} parent=0 // loop_footer
    %s16 = sadd.s32 1, %s12
  $region7: #{_forward_device.3} parent=0 // loop_footer_branch
    %11 = sbr.rel target = $region3
  $region8: #{_forward_device.3} parent=0 // loop_exit
    _

// kernel: _forward_device.5
$region0: #{_forward_device.5}
  #allocation0 [shape = 'u32[]', space=smem, size = 0x4, offset = 0x4, fixed_abs, tag = 'smem constant byte address 0x4 - core index']
  #allocation1 [shape = 'u32[72,128]{1,0:T(1,128)}', space=vmem, size = 0x9000, scoped, tag = 'internal scratch']
  %s0 = inlined_call_operand.vmem [shape: bf16[8,768], index: 0, kind: input, shape index: {}]
  %s1 = inlined_call_operand.vmem [shape: bf16[8,768], index: 1, kind: input, shape index: {}]
  %s2 = inlined_call_operand.vmem [shape: bf16[8,768], index: 2, kind: input, shape index: {}]
  %s3 = inlined_call_operand.vmem [shape: f32[2,8,8], index: 3, kind: input, shape index: {}]
  %s4 = inlined_call_operand.vmem [shape: f32[8,3], index: 4, kind: input, shape index: {}]
  %s5 = inlined_call_operand.hbm [shape: f32[8,768], index: 5, kind: output, shape index: {}]
  %s6 = sld [smem:[#allocation0]]
  $region53: #{_forward_device.5} parent=0
    _
  %s8 = ssub.s32 1, %s6
  %s9 = scalar_select 0, %s8, %s6
  $region1: #{_forward_device.5} parent=0
    #allocation2 [shape = 'u8[24576]{0}', space=vmem, size = 0x6000, scoped, tag = 'output window, operand 0']
    #allocation3 [shape = 's32[2]{0}', space=sflag, size = 0x8, scoped, tag = 'scoped memory for _forward_device.5']
    %10 = vsyncpa [#allocation3], 0
    %s11 = scalar_lea.sflag [#allocation3], 1
    %12 = vsyncpa %s11, 0
    loop: start=0, step=1, limit=4
    $region2: #{_forward_device.5} parent=1 // loop_pre_header
      _
    $region3: #{_forward_device.5} parent=1 // loop_header
      %s14 = sphi 0, %s18
      %p15 = scmp.ge.s32.totalorder %s14, 4
      %s24 = sphi 0, %s26
      %s27 = sphi 0, %s24
      %s28 = sphi 0, %s27
      %s44 = sphi 0, %s28
      %s50 = sphi 0, %s52
      %s53 = sphi 0, %s50
      %s54 = sphi 0, %s53
      %s70 = sphi 0, %s54
      %s76 = sphi 0, %s78
      %s79 = sphi 0, %s76
      %s80 = sphi 0, %s79
      %s96 = sphi 0, %s80
      %s100 = sphi 0, %s100
      %s102 = sphi 0, %s100
      %s103 = sphi 0, %s102
      %s117 = sphi 0, %s103
      %s121 = sphi 0, %s121
      %s123 = sphi 0, %s121
      %s124 = sphi 0, %s123
      %s138 = sphi 0, %s124
      %s144 = sphi 0, %s146
      %s147 = sphi 0, %s144
      %s148 = sphi 0, %s147
      %s164 = sphi 0, %s148
    $region4: #{_forward_device.5} parent=1 // loop_header_branch
      %17 = sbr.rel (%p15) target = $region8
    $region5: #{_forward_device.5} parent=1 // loop_body
      %s19 = ssub.s32 %s14, 1
      %s20 = ssub.s32 %s14, 2
      %s21 = sadd.s32 %s14, 1
      %s22 = ssub.s32 %s14, %s21
      %p23 = scmp.eq.s32.totalorder %s22, 0
      %s25 = sadd.s32 %s24, 1
      %s26 = scalar_select %p23, %s24, %s25
      %p29 = pneg %p23
      %p30 = scmp.eq.s32.totalorder %s14, 1
      %p31 = por %p29, %p30
      %p32 = scmp.ne.s32.totalorder %s24, %s27
      %p33 = scmp.eq.s32.totalorder %s14, 0
      %p34 = por %p32, %p33
      %p35 = scmp.ne.s32.totalorder %s24, %s27
      %p36 = scmp.eq.s32.totalorder %s19, 1
      %p37 = por %p35, %p36
      %p38 = scmp.ne.s32.totalorder %s27, %s28
      %p39 = scmp.eq.s32.totalorder %s19, 0
      %p40 = por %p38, %p39
      %p41 = scmp.ne.s32.totalorder %s27, %s28
      %p42 = scmp.eq.s32.totalorder %s20, 1
      %p43 = por %p41, %p42
      %p45 = scmp.ne.s32.totalorder %s28, %s44
      %p46 = scmp.eq.s32.totalorder %s20, 0
      %p47 = por %p45, %p46
      %s48 = ssub.s32 %s14, %s21
      %p49 = scmp.eq.s32.totalorder %s48, 0
      %s51 = sadd.s32 %s50, 1
      %s52 = scalar_select %p49, %s50, %s51
      %p55 = pneg %p49
      %p56 = scmp.eq.s32.totalorder %s14, 1
      %p57 = por %p55, %p56
      %p58 = scmp.ne.s32.totalorder %s50, %s53
      %p59 = scmp.eq.s32.totalorder %s14, 0
      %p60 = por %p58, %p59
      %p61 = scmp.ne.s32.totalorder %s50, %s53
      %p62 = scmp.eq.s32.totalorder %s19, 1
      %p63 = por %p61, %p62
      %p64 = scmp.ne.s32.totalorder %s53, %s54
      %p65 = scmp.eq.s32.totalorder %s19, 0
      %p66 = por %p64, %p65
      %p67 = scmp.ne.s32.totalorder %s53, %s54
      %p68 = scmp.eq.s32.totalorder %s20, 1
      %p69 = por %p67, %p68
      %p71 = scmp.ne.s32.totalorder %s54, %s70
      %p72 = scmp.eq.s32.totalorder %s20, 0
      %p73 = por %p71, %p72
      %s74 = ssub.s32 %s14, %s21
      %p75 = scmp.eq.s32.totalorder %s74, 0
      %s77 = sadd.s32 %s76, 1
      %s78 = scalar_select %p75, %s76, %s77
      %p81 = pneg %p75
      %p82 = scmp.eq.s32.totalorder %s14, 1
      %p83 = por %p81, %p82
      %p84 = scmp.ne.s32.totalorder %s76, %s79
      %p85 = scmp.eq.s32.totalorder %s14, 0
      %p86 = por %p84, %p85
      %p87 = scmp.ne.s32.totalorder %s76, %s79
      %p88 = scmp.eq.s32.totalorder %s19, 1
      %p89 = por %p87, %p88
      %p90 = scmp.ne.s32.totalorder %s79, %s80
      %p91 = scmp.eq.s32.totalorder %s19, 0
      %p92 = por %p90, %p91
      %p93 = scmp.ne.s32.totalorder %s79, %s80
      %p94 = scmp.eq.s32.totalorder %s20, 1
      %p95 = por %p93, %p94
      %p97 = scmp.ne.s32.totalorder %s80, %s96
      %p98 = scmp.eq.s32.totalorder %s20, 0
      %p99 = por %p97, %p98
      %s101 = sadd.s32 %s100, 1
      %p104 = scmp.eq.s32.totalorder %s14, 1
      %p105 = scmp.ne.s32.totalorder %s100, %s102
      %p106 = scmp.eq.s32.totalorder %s14, 0
      %p107 = por %p105, %p106
      %p108 = scmp.ne.s32.totalorder %s100, %s102
      %p109 = scmp.eq.s32.totalorder %s19, 1
      %p110 = por %p108, %p109
      %p111 = scmp.ne.s32.totalorder %s102, %s103
      %p112 = scmp.eq.s32.totalorder %s19, 0
      %p113 = por %p111, %p112
      %p114 = scmp.ne.s32.totalorder %s102, %s103
      %p115 = scmp.eq.s32.totalorder %s20, 1
      %p116 = por %p114, %p115
      %p118 = scmp.ne.s32.totalorder %s103, %s117
      %p119 = scmp.eq.s32.totalorder %s20, 0
      %p120 = por %p118, %p119
      %s122 = sadd.s32 %s121, 1
      %p125 = scmp.eq.s32.totalorder %s14, 1
      %p126 = scmp.ne.s32.totalorder %s121, %s123
      %p127 = scmp.eq.s32.totalorder %s14, 0
      %p128 = por %p126, %p127
      %p129 = scmp.ne.s32.totalorder %s121, %s123
      %p130 = scmp.eq.s32.totalorder %s19, 1
      %p131 = por %p129, %p130
      %p132 = scmp.ne.s32.totalorder %s123, %s124
      %p133 = scmp.eq.s32.totalorder %s19, 0
      %p134 = por %p132, %p133
      %p135 = scmp.ne.s32.totalorder %s123, %s124
      %p136 = scmp.eq.s32.totalorder %s20, 1
      %p137 = por %p135, %p136
      %p139 = scmp.ne.s32.totalorder %s124, %s138
      %p140 = scmp.eq.s32.totalorder %s20, 0
      %p141 = por %p139, %p140
      %s142 = ssub.s32 %s14, %s21
      %p143 = scmp.eq.s32.totalorder %s142, 0
      %s145 = sadd.s32 %s144, 1
      %s146 = scalar_select %p143, %s144, %s145
      %p149 = pneg %p143
      %p150 = scmp.eq.s32.totalorder %s14, 1
      %p151 = por %p149, %p150
      %p152 = scmp.ne.s32.totalorder %s144, %s147
      %p153 = scmp.eq.s32.totalorder %s14, 0
      %p154 = por %p152, %p153
      %p155 = scmp.ne.s32.totalorder %s144, %s147
      %p156 = scmp.eq.s32.totalorder %s19, 1
      %p157 = por %p155, %p156
      %p158 = scmp.ne.s32.totalorder %s147, %s148
      %p159 = scmp.eq.s32.totalorder %s19, 0
      %p160 = por %p158, %p159
      %p161 = scmp.ne.s32.totalorder %s147, %s148
      %p162 = scmp.eq.s32.totalorder %s20, 1
      %p163 = por %p161, %p162
      %p165 = scmp.ne.s32.totalorder %s148, %s164
      %p166 = scmp.eq.s32.totalorder %s20, 0
      %p167 = por %p165, %p166
      %p168 = scmp.le.s32.totalorder 1, %s14
      %p169 = scmp.lt.s32.totalorder %s14, 3
      %p170 = pnand %p168, %p169
      %p171 = pneg %p170
      // Predicated region
      $region9: #{_forward_device.5} parent=5 // pred_check
        _
      $region10: #{_forward_device.5} parent=5 // pred_check_branch
        %173 = sbr.rel (%p170) target = $region12
      $region11: #{_forward_device.5} parent=5 // pred_region
        %s174 = ssub.s32 %s14, 1
        // Predicated region
        $region13: #{_forward_device.5} parent=11 // pred_check
          %p175 = pneg %p113
        $region14: #{_forward_device.5} parent=11 // pred_check_branch
          %177 = sbr.rel (%p175) target = $region16
        $region15: #{_forward_device.5} parent=11 // pred_region
          _
        $region16: #{_forward_device.5} parent=11 // pred_fallthru
          _
        // Predicated region
        $region17: #{_forward_device.5} parent=11 // pred_check
          %p178 = pneg %p134
        $region18: #{_forward_device.5} parent=11 // pred_check_branch
          %180 = sbr.rel (%p178) target = $region20
        $region19: #{_forward_device.5} parent=11 // pred_region
          _
        $region20: #{_forward_device.5} parent=11 // pred_fallthru
          _
      $region12: #{_forward_device.5} parent=5 // pred_fallthru
        _
      %p181 = scmp.lt.s32.totalorder %s14, 2
      // Predicated region
      $region21: #{_forward_device.5} parent=5 // pred_check
        %p182 = pneg %p181
      $region22: #{_forward_device.5} parent=5 // pred_check_branch
        %184 = sbr.rel (%p182) target = $region24
      $region23: #{_forward_device.5} parent=5 // pred_region
        // Predicated region
        $region25: #{_forward_device.5} parent=23 // pred_check
          %p185 = pneg %p34
        $region26: #{_forward_device.5} parent=23 // pred_check_branch
          %187 = sbr.rel (%p185) target = $region28
        $region27: #{_forward_device.5} parent=23 // pred_region
          %s188 = smul.u32 3, %s14
          %p189 = scmp.lt.s32.totalorder %s188, 5
          %s190 = scalar_select %p189, %s188, 5
          %s191 = smul.addr %s190, 4
          %s192 = scalar_lea.vmem %s0, %s191
          %s193 = smul.u32 3, %s14
        $region28: #{_forward_device.5} parent=23 // pred_fallthru
          _
        // Predicated region
        $region29: #{_forward_device.5} parent=23 // pred_check
          %p194 = pneg %p60
        $region30: #{_forward_device.5} parent=23 // pred_check_branch
          %196 = sbr.rel (%p194) target = $region32
        $region31: #{_forward_device.5} parent=23 // pred_region
          %s197 = smul.u32 3, %s14
          %p198 = scmp.lt.s32.totalorder %s197, 5
          %s199 = scalar_select %p198, %s197, 5
          %s200 = smul.addr %s199, 4
          %s201 = scalar_lea.vmem %s1, %s200
          %s202 = smul.u32 3, %s14
        $region32: #{_forward_device.5} parent=23 // pred_fallthru
          _
        // Predicated region
        $region33: #{_forward_device.5} parent=23 // pred_check
          %p203 = pneg %p86
        $region34: #{_forward_device.5} parent=23 // pred_check_branch
          %205 = sbr.rel (%p203) target = $region36
        $region35: #{_forward_device.5} parent=23 // pred_region
          %s206 = smul.u32 3, %s14
          %p207 = scmp.lt.s32.totalorder %s206, 5
          %s208 = scalar_select %p207, %s206, 5
          %s209 = smul.addr %s208, 4
          %s210 = scalar_lea.vmem %s2, %s209
          %s211 = smul.u32 3, %s14
        $region36: #{_forward_device.5} parent=23 // pred_fallthru
          _
      $region24: #{_forward_device.5} parent=5 // pred_fallthru
        _
      %p212 = scmp.le.s32.totalorder 1, %s14
      %p213 = scmp.lt.s32.totalorder %s14, 3
      %p214 = pnand %p212, %p213
      %p215 = pneg %p214
      // Predicated region
      $region37: #{_forward_device.5} parent=5 // pred_check
        _
      $region38: #{_forward_device.5} parent=5 // pred_check_branch
        %217 = sbr.rel (%p214) target = $region40
      $region39: #{_forward_device.5} parent=5 // pred_region
        %s218 = ssub.s32 %s14, 1
        %s219 = smul.u32 3, %s19
        %p220 = scmp.lt.s32.totalorder %s219, 5
        %s221 = scalar_select %p220, %s219, 5
        %s222 = smul.addr %s221, 4
        %s223 = scalar_lea.vmem %s0, %s222
        %p224 = pneg %p40
        %p225 = pneg %p37
        %s226 = smul.u32 3, %s19
        %p227 = scmp.lt.s32.totalorder %s226, 5
        %s228 = scalar_select %p227, %s226, 5
        %s229 = smul.addr %s228, 4
        %s230 = scalar_lea.vmem %s1, %s229
        %p231 = pneg %p66
        %p232 = pneg %p63
        %s233 = smul.u32 3, %s19
        %p234 = scmp.lt.s32.totalorder %s233, 5
        %s235 = scalar_select %p234, %s233, 5
        %s236 = smul.addr %s235, 4
        %s237 = scalar_lea.vmem %s2, %s236
        %p238 = pneg %p92
        %p239 = pneg %p89
        %p240 = pneg %p113
        %p241 = pneg %p110
        %p242 = pneg %p134
        %p243 = pneg %p131
        %p244 = pneg %p160
        %p245 = pneg %p157
        %s246 = sand.u32 %s147, 1
        %s247 = scalar_lea.sflag [#allocation3], %s246
        %s248 = sand.u32 %s147, 1
        %s249 = smul.addr %s248, 24
        %s250 = scalar_lea.vmem [#allocation2], %s249
        %s251 = smul.u32 3, %s19
        %p252 = scmp.lt.s32.totalorder %s251, 5
        %s253 = scalar_select %p252, %s251, 5
        %s254 = smul.addr %s253, 4
        %s255 = scalar_lea.vmem %s0, %s254
        %s256 = smul.u32 3, %s19
        %s257 = smul.u32 3, %s19
        %p258 = scmp.lt.s32.totalorder %s257, 5
        %s259 = scalar_select %p258, %s257, 5
        %s260 = smul.addr %s259, 4
        %s261 = scalar_lea.vmem %s1, %s260
        %s262 = smul.u32 3, %s19
        %s263 = smul.u32 3, %s19
        %p264 = scmp.lt.s32.totalorder %s263, 5
        %s265 = scalar_select %p264, %s263, 5
        %s266 = smul.addr %s265, 4
        %s267 = scalar_lea.vmem %s2, %s266
        %s268 = smul.u32 3, %s19
        %s269 = smul.u32 3, %s19
        %v270 = vld [vmem:[%s255] sm:$0xff]
        %v271 = vld [vmem:[%s255 + $0x8] sm:$0xf]
        %v272 = vunpack.c.l.bf16 %v270
        %v273 = vunpack.c.h.bf16 %v270
        %v274 = vunpack.c.l.bf16 %v271
        %v275 = vld [vmem:[%s261] sm:$0xff]
        %v276 = vld [vmem:[%s261 + $0x8] sm:$0xf]
        %v277 = vunpack.c.l.bf16 %v275
        %v278 = vunpack.c.h.bf16 %v275
        %v279 = vunpack.c.l.bf16 %v276
        %v280 = vld [vmem:[%s3] sm:$0xff]
        %s281 = scalar_lea.vmem %s3, 8
        %v282 = vld [vmem:[%s281] sm:$0xff]
        %vm283 = vcmask 64512
        %v285 = vsel %vm283, %v282, 0
        %287 = vmatpush.msra.mxu0 0.0
        %288 = vmatpush.msra.mxu0 0.0
        %289 = vmatpush.msra.mxu0 0.0
        %290 = vmatpush.msra.mxu0 0.0
        %291 = vmatpush.msra.mxu0 0.0
        %292 = vmatpush.msra.mxu0 0.0
        %293 = vmatpush.msra.mxu0 0.0
        %294 = vmatpush.msra.mxu0 0.0
        %295 = vmatpush.msra.mxu0 0.0
        %296 = vmatpush.msra.mxu0 0.0
        %297 = vmatpush.msra.mxu0 0.0
        %298 = vmatpush.msra.mxu0 0.0
        %299 = vmatpush.msra.mxu0 0.0
        %300 = vmatpush.msra.mxu0 0.0
        %301 = vmatpush.msra.mxu0 0.0
        %302 = vmatpush.msra.mxu0 %v277
        %303 = vmatmul.f32.gmra.mxu0 %v285
        %v304 = vpop.f32.mrf.mxu0
        %v305 = vadd.f32 0.0, %v304
        %306 = vdwg.mxu0
        %307 = vmatpush.msra.mxu0 0.0
        %308 = vmatpush.msra.mxu0 0.0
        %309 = vmatpush.msra.mxu0 0.0
        %310 = vmatpush.msra.mxu0 0.0
        %311 = vmatpush.msra.mxu0 0.0
        %312 = vmatpush.msra.mxu0 0.0
        %313 = vmatpush.msra.mxu0 0.0
        %314 = vmatpush.msra.mxu0 0.0
        %315 = vmatpush.msra.mxu0 0.0
        %316 = vmatpush.msra.mxu0 0.0
        %317 = vmatpush.msra.mxu0 0.0
        %318 = vmatpush.msra.mxu0 0.0
        %319 = vmatpush.msra.mxu0 0.0
        %320 = vmatpush.msra.mxu0 0.0
        %321 = vmatpush.msra.mxu0 0.0
        %322 = vmatpush.msra.mxu0 %v278
        %323 = vmatmul.f32.gmra.mxu0 %v285
        %v324 = vpop.f32.mrf.mxu0
        %v325 = vadd.f32 0.0, %v324
        %326 = vdwg.mxu0
        %327 = vmatpush.msra.mxu0 0.0
        %328 = vmatpush.msra.mxu0 0.0
        %329 = vmatpush.msra.mxu0 0.0
        %330 = vmatpush.msra.mxu0 0.0
        %331 = vmatpush.msra.mxu0 0.0
        %332 = vmatpush.msra.mxu0 0.0
        %333 = vmatpush.msra.mxu0 0.0
        %334 = vmatpush.msra.mxu0 0.0
        %335 = vmatpush.msra.mxu0 0.0
        %336 = vmatpush.msra.mxu0 0.0
        %337 = vmatpush.msra.mxu0 0.0
        %338 = vmatpush.msra.mxu0 0.0
        %339 = vmatpush.msra.mxu0 0.0
        %340 = vmatpush.msra.mxu0 0.0
        %341 = vmatpush.msra.mxu0 0.0
        %342 = vmatpush.msra.mxu0 %v279
        %343 = vmatmul.f32.gmra.mxu0 %v285
        %v344 = vpop.f32.mrf.mxu0
        %v345 = vadd.f32 0.0, %v344
        %346 = vdwg.mxu0
        %v348 = vsel %vm283, %v280, 0
        %350 = vmatpush.msra.mxu0 0.0
        %351 = vmatpush.msra.mxu0 0.0
        %352 = vmatpush.msra.mxu0 0.0
        %353 = vmatpush.msra.mxu0 0.0
        %354 = vmatpush.msra.mxu0 0.0
        %355 = vmatpush.msra.mxu0 0.0
        %356 = vmatpush.msra.mxu0 0.0
        %357 = vmatpush.msra.mxu0 0.0
        %358 = vmatpush.msra.mxu0 0.0
        %359 = vmatpush.msra.mxu0 0.0
        %360 = vmatpush.msra.mxu0 0.0
        %361 = vmatpush.msra.mxu0 0.0
        %362 = vmatpush.msra.mxu0 0.0
        %363 = vmatpush.msra.mxu0 0.0
        %364 = vmatpush.msra.mxu0 0.0
        %365 = vmatpush.msra.mxu0 %v272
        %366 = vmatmul.f32.gmra.mxu0 %v348
        %v367 = vpop.f32.mrf.mxu0
        %v368 = vadd.f32 %v305, %v367
        %369 = vdwg.mxu0
        %370 = vmatpush.msra.mxu0 0.0
        %371 = vmatpush.msra.mxu0 0.0
        %372 = vmatpush.msra.mxu0 0.0
        %373 = vmatpush.msra.mxu0 0.0
        %374 = vmatpush.msra.mxu0 0.0
        %375 = vmatpush.msra.mxu0 0.0
        %376 = vmatpush.msra.mxu0 0.0
        %377 = vmatpush.msra.mxu0 0.0
        %378 = vmatpush.msra.mxu0 0.0
        %379 = vmatpush.msra.mxu0 0.0
        %380 = vmatpush.msra.mxu0 0.0
        %381 = vmatpush.msra.mxu0 0.0
        %382 = vmatpush.msra.mxu0 0.0
        %383 = vmatpush.msra.mxu0 0.0
        %384 = vmatpush.msra.mxu0 0.0
        %385 = vmatpush.msra.mxu0 %v273
        %386 = vmatmul.f32.gmra.mxu0 %v348
        %v387 = vpop.f32.mrf.mxu0
        %v388 = vadd.f32 %v325, %v387
        %389 = vdwg.mxu0
        %390 = vmatpush.msra.mxu0 0.0
        %391 = vmatpush.msra.mxu0 0.0
        %392 = vmatpush.msra.mxu0 0.0
        %393 = vmatpush.msra.mxu0 0.0
        %394 = vmatpush.msra.mxu0 0.0
        %395 = vmatpush.msra.mxu0 0.0
        %396 = vmatpush.msra.mxu0 0.0
        %397 = vmatpush.msra.mxu0 0.0
        %398 = vmatpush.msra.mxu0 0.0
        %399 = vmatpush.msra.mxu0 0.0
        %400 = vmatpush.msra.mxu0 0.0
        %401 = vmatpush.msra.mxu0 0.0
        %402 = vmatpush.msra.mxu0 0.0
        %403 = vmatpush.msra.mxu0 0.0
        %404 = vmatpush.msra.mxu0 0.0
        %405 = vmatpush.msra.mxu0 %v274
        %406 = vmatmul.f32.gmra.mxu0 %v348
        %v407 = vpop.f32.mrf.mxu0
        %v408 = vadd.f32 %v345, %v407
        %409 = vdwg.mxu0
        %v410 = vld [vmem:[%s4] sm:$0xff]
        %412 = vset.pattern.permute.xlu0 0
        %413 = vperm.xlu0 %412, %v410
        %v414 = vpop.permute.xlu0 %413
        %v416 = vadd.f32 %v368, %v414
        %v417 = vadd.f32 %v388, %v414
        %v418 = vadd.f32 %v408, %v414
        %v419 = vrot.slane %v416, 4
        %v420 = vadd.f32 %v416, %v419
        %v421 = vrot.slane %v420, 2
        %v422 = vadd.f32 %v420, %v421
        %v423 = vrot.slane %v422, 1
        %v424 = vadd.f32 %v422, %v423
        %v425 = vrot.slane %v417, 4
        %v426 = vadd.f32 %v417, %v425
        %v427 = vrot.slane %v426, 2
        %v428 = vadd.f32 %v426, %v427
        %v429 = vrot.slane %v428, 1
        %v430 = vadd.f32 %v428, %v429
        %v431 = vrot.slane %v418, 4
        %v432 = vadd.f32 %v418, %v431
        %v433 = vrot.slane %v432, 2
        %v434 = vadd.f32 %v432, %v433
        %v435 = vrot.slane %v434, 1
        %v436 = vadd.f32 %v434, %v435
        %v437 = vrcp.pop 8.0
        %v438 = vmul.f32 8.0, %v437
        %v439 = vsub.f32 1.0, %v438
        %v440 = vmul.f32 %v437, %v439
        %v441 = vadd.f32 %v437, %v440
        %vm442 = vweird.f32 %v437
        %v443 = vsel %vm442, %v437, %v441
        %v444 = vmul.f32 %v424, %v443
        %v445 = vmul.f32 %v430, %v443
        %v446 = vmul.f32 %v436, %v443
        %v447 = vsub.f32 %v416, %v444
        %v448 = vsub.f32 %v417, %v445
        %v449 = vsub.f32 %v418, %v446
        %v450 = vmul.f32 %v447, %v447
        %v451 = vmul.f32 %v448, %v448
        %v452 = vmul.f32 %v449, %v449
        %v453 = vrot.slane %v450, 4
        %v454 = vadd.f32 %v450, %v453
        %v455 = vrot.slane %v454, 2
        %v456 = vadd.f32 %v454, %v455
        %v457 = vrot.slane %v456, 1
        %v458 = vadd.f32 %v456, %v457
        %v459 = vrot.slane %v451, 4
        %v460 = vadd.f32 %v451, %v459
        %v461 = vrot.slane %v460, 2
        %v462 = vadd.f32 %v460, %v461
        %v463 = vrot.slane %v462, 1
        %v464 = vadd.f32 %v462, %v463
        %v465 = vrot.slane %v452, 4
        %v466 = vadd.f32 %v452, %v465
        %v467 = vrot.slane %v466, 2
        %v468 = vadd.f32 %v466, %v467
        %v469 = vrot.slane %v468, 1
        %v470 = vadd.f32 %v468, %v469
        %v471 = vmul.f32 %v458, %v443
        %v472 = vmul.f32 %v464, %v443
        %v473 = vmul.f32 %v470, %v443
        %v474 = vadd.f32 %v471, 1e-05
        %v475 = vadd.f32 %v472, 1e-05
        %v476 = vadd.f32 %v473, 1e-05
        %v477 = vrsqrt.pop %v474
        %v478 = vmul.f32 %v477, %v474
        %v479 = vmul.f32 %v478, %v477
        %v480 = vmul.f32 0.5, %v479
        %v481 = vsub.f32 1.5, %v480
        %v482 = vmul.f32 %v477, %v481
        %vm483 = vweird.f32 %v474
        %vm484 = vweird.f32 %v477
        %vm485 = vmor %vm483, %vm484
        %v486 = vsel %vm485, %v477, %v482
        %v487 = vrsqrt.pop %v475
        %v488 = vmul.f32 %v487, %v475
        %v489 = vmul.f32 %v488, %v487
        %v490 = vmul.f32 0.5, %v489
        %v491 = vsub.f32 1.5, %v490
        %v492 = vmul.f32 %v487, %v491
        %vm493 = vweird.f32 %v475
        %vm494 = vweird.f32 %v487
        %vm495 = vmor %vm493, %vm494
        %v496 = vsel %vm495, %v487, %v492
        %v497 = vrsqrt.pop %v476
        %v498 = vmul.f32 %v497, %v476
        %v499 = vmul.f32 %v498, %v497
        %v500 = vmul.f32 0.5, %v499
        %v501 = vsub.f32 1.5, %v500
        %v502 = vmul.f32 %v497, %v501
        %vm503 = vweird.f32 %v476
        %vm504 = vweird.f32 %v497
        %vm505 = vmor %vm503, %vm504
        %v506 = vsel %vm505, %v497, %v502
        %v507 = vmul.f32 %v447, %v486
        %v508 = vmul.f32 %v448, %v496
        %v509 = vmul.f32 %v449, %v506
        %510 = vset.pattern.permute.xlu0 1
        %511 = vperm.xlu0 %510, %v410
        %v512 = vpop.permute.xlu0 %511
        %v514 = vmul.f32 %v507, %v512
        %v515 = vmul.f32 %v508, %v512
        %v516 = vmul.f32 %v509, %v512
        %517 = vset.pattern.permute.xlu0 2
        %518 = vperm.xlu0 %517, %v410
        %v519 = vpop.permute.xlu0 %518
        %v521 = vadd.f32 %v514, %v519
        %v522 = vadd.f32 %v515, %v519
        %v523 = vadd.f32 %v516, %v519
        %v524 = vmax.f32 %v521, 0.0
        %v525 = vmax.f32 %v522, 0.0
        %v526 = vmax.f32 %v523, 0.0
        %v527 = vld [vmem:[%s267] sm:$0xff]
        %v528 = vld [vmem:[%s267 + $0x8] sm:$0xf]
        %v529 = vunpack.c.l.bf16 %v527
        %v530 = vunpack.c.h.bf16 %v527
        %v531 = vunpack.c.l.bf16 %v528
        %v532 = vadd.f32 %v524, %v529
        %v533 = vadd.f32 %v525, %v530
        %v534 = vadd.f32 %v526, %v531
        %535 = vst [vmem:[%s250] sm:$0xff] %v532
        %536 = vst [vmem:[%s250 + $0x8] sm:$0xff] %v533
        %537 = vst [vmem:[%s250 + $0x10] sm:$0xff] %v534
        %s538 = sand.u32 %s147, 1
        %s539 = scalar_lea.sflag [#allocation3], %s538
        %s540 = sand.u32 %s147, 1
        %s541 = smul.addr %s540, 24
        %s542 = scalar_lea.vmem [#allocation2], %s541
        // Predicated region
        $region41: #{_forward_device.5} parent=39 // pred_check
          %p543 = pneg %p157
        $region42: #{_forward_device.5} parent=39 // pred_check_branch
          %545 = sbr.rel (%p543) target = $region44
        $region43: #{_forward_device.5} parent=39 // pred_region
          %s546 = smul.u32 3, %s19
          %548 = vsyncadd %s539, 0
          %s549 = smul.addr %s546, 8
          %s550 = scalar_lea.hbm %s5, %s549
          %s552 = sshll.u32 %s542, 4
          %s553 = int_to_ptr.vmem [resolvable:$true] %s552
          %s554 = sshll.u32 %s550, 4
          %s555 = int_to_ptr.hbm [resolvable:$true] %s554
          %557 = dma.vmem_to_hbm [thread:$0]  %s553, 384, %s555, %s539
        $region44: #{_forward_device.5} parent=39 // pred_fallthru
          _
      $region40: #{_forward_device.5} parent=5 // pred_fallthru
        _
      %p558 = scmp.le.s32.totalorder 2, %s14
      // Predicated region
      $region45: #{_forward_device.5} parent=5 // pred_check
        %p559 = pneg %p558
      $region46: #{_forward_device.5} parent=5 // pred_check_branch
        %561 = sbr.rel (%p559) target = $region48
      $region47: #{_forward_device.5} parent=5 // pred_region
        %s562 = ssub.s32 %s14, 2
        // Predicated region
        $region49: #{_forward_device.5} parent=47 // pred_check
          %p563 = pneg %p163
        $region50: #{_forward_device.5} parent=47 // pred_check_branch
          %565 = sbr.rel (%p563) target = $region52
        $region51: #{_forward_device.5} parent=47 // pred_region
          %s566 = sand.u32 %s148, 1
          %s567 = scalar_lea.sflag [#allocation3], %s566
          %s568 = sand.u32 %s148, 1
          %s569 = smul.addr %s568, 24
          %s570 = scalar_lea.vmem [#allocation2], %s569
          %572 = dma.done %s567, 384
        $region52: #{_forward_device.5} parent=47 // pred_fallthru
          _
      $region48: #{_forward_device.5} parent=5 // pred_fallthru
        _
    $region6: #{_forward_device.5} parent=1 // loop_footer
      %s18 = sadd.s32 1, %s14
    $region7: #{_forward_device.5} parent=1 // loop_footer_branch
      %13 = sbr.rel target = $region3
    $region8: #{_forward_device.5} parent=1 // loop_exit
      _
    %573 = vsyncpa [#allocation3], 1
    %s574 = scalar_lea.sflag [#allocation3], 1
    %575 = vsyncpa %s574, 1

// kernel: _forward_device.4
$region0: #{_forward_device.4}
  #allocation0 [shape = 'u32[]', space=smem, size = 0x4, offset = 0x4, fixed_abs, tag = 'smem constant byte address 0x4 - core index']
  #allocation1 [shape = 'u32[72,128]{1,0:T(1,128)}', space=vmem, size = 0x9000, scoped, tag = 'internal scratch']
  %s0 = inlined_call_operand.vmem [shape: bf16[8,768], index: 0, kind: input, shape index: {}]
  %s1 = inlined_call_operand.vmem [shape: bf16[8,768], index: 1, kind: input, shape index: {}]
  %s2 = inlined_call_operand.vmem [shape: f32[2,8,8], index: 2, kind: input, shape index: {}]
  %s3 = inlined_call_operand.vmem [shape: f32[8,3], index: 3, kind: input, shape index: {}]
  %s4 = inlined_call_operand.vmem [shape: bf16[8,768], index: 4, kind: output, shape index: {}]
  %s5 = sld [smem:[#allocation0]]
  $region49: #{_forward_device.4} parent=0
    _
  %s7 = ssub.s32 1, %s5
  %s8 = scalar_select 0, %s7, %s5
  loop: start=0, step=1, limit=4
  $region2: #{_forward_device.4} parent=0 // loop_pre_header
    _
  $region3: #{_forward_device.4} parent=0 // loop_header
    %s10 = sphi 0, %s14
    %p11 = scmp.ge.s32.totalorder %s10, 4
    %s20 = sphi 0, %s22
    %s23 = sphi 0, %s20
    %s24 = sphi 0, %s23
    %s40 = sphi 0, %s24
    %s46 = sphi 0, %s48
    %s49 = sphi 0, %s46
    %s50 = sphi 0, %s49
    %s66 = sphi 0, %s50
    %s70 = sphi 0, %s70
    %s72 = sphi 0, %s70
    %s73 = sphi 0, %s72
    %s87 = sphi 0, %s73
    %s91 = sphi 0, %s91
    %s93 = sphi 0, %s91
    %s94 = sphi 0, %s93
    %s108 = sphi 0, %s94
    %s114 = sphi 0, %s116
    %s117 = sphi 0, %s114
    %s118 = sphi 0, %s117
    %s134 = sphi 0, %s118
  $region4: #{_forward_device.4} parent=0 // loop_header_branch
    %13 = sbr.rel (%p11) target = $region8
  $region5: #{_forward_device.4} parent=0 // loop_body
    %s15 = ssub.s32 %s10, 1
    %s16 = ssub.s32 %s10, 2
    %s17 = sadd.s32 %s10, 1
    %s18 = ssub.s32 %s10, %s17
    %p19 = scmp.eq.s32.totalorder %s18, 0
    %s21 = sadd.s32 %s20, 1
    %s22 = scalar_select %p19, %s20, %s21
    %p25 = pneg %p19
    %p26 = scmp.eq.s32.totalorder %s10, 1
    %p27 = por %p25, %p26
    %p28 = scmp.ne.s32.totalorder %s20, %s23
    %p29 = scmp.eq.s32.totalorder %s10, 0
    %p30 = por %p28, %p29
    %p31 = scmp.ne.s32.totalorder %s20, %s23
    %p32 = scmp.eq.s32.totalorder %s15, 1
    %p33 = por %p31, %p32
    %p34 = scmp.ne.s32.totalorder %s23, %s24
    %p35 = scmp.eq.s32.totalorder %s15, 0
    %p36 = por %p34, %p35
    %p37 = scmp.ne.s32.totalorder %s23, %s24
    %p38 = scmp.eq.s32.totalorder %s16, 1
    %p39 = por %p37, %p38
    %p41 = scmp.ne.s32.totalorder %s24, %s40
    %p42 = scmp.eq.s32.totalorder %s16, 0
    %p43 = por %p41, %p42
    %s44 = ssub.s32 %s10, %s17
    %p45 = scmp.eq.s32.totalorder %s44, 0
    %s47 = sadd.s32 %s46, 1
    %s48 = scalar_select %p45, %s46, %s47
    %p51 = pneg %p45
    %p52 = scmp.eq.s32.totalorder %s10, 1
    %p53 = por %p51, %p52
    %p54 = scmp.ne.s32.totalorder %s46, %s49
    %p55 = scmp.eq.s32.totalorder %s10, 0
    %p56 = por %p54, %p55
    %p57 = scmp.ne.s32.totalorder %s46, %s49
    %p58 = scmp.eq.s32.totalorder %s15, 1
    %p59 = por %p57, %p58
    %p60 = scmp.ne.s32.totalorder %s49, %s50
    %p61 = scmp.eq.s32.totalorder %s15, 0
    %p62 = por %p60, %p61
    %p63 = scmp.ne.s32.totalorder %s49, %s50
    %p64 = scmp.eq.s32.totalorder %s16, 1
    %p65 = por %p63, %p64
    %p67 = scmp.ne.s32.totalorder %s50, %s66
    %p68 = scmp.eq.s32.totalorder %s16, 0
    %p69 = por %p67, %p68
    %s71 = sadd.s32 %s70, 1
    %p74 = scmp.eq.s32.totalorder %s10, 1
    %p75 = scmp.ne.s32.totalorder %s70, %s72
    %p76 = scmp.eq.s32.totalorder %s10, 0
    %p77 = por %p75, %p76
    %p78 = scmp.ne.s32.totalorder %s70, %s72
    %p79 = scmp.eq.s32.totalorder %s15, 1
    %p80 = por %p78, %p79
    %p81 = scmp.ne.s32.totalorder %s72, %s73
    %p82 = scmp.eq.s32.totalorder %s15, 0
    %p83 = por %p81, %p82
    %p84 = scmp.ne.s32.totalorder %s72, %s73
    %p85 = scmp.eq.s32.totalorder %s16, 1
    %p86 = por %p84, %p85
    %p88 = scmp.ne.s32.totalorder %s73, %s87
    %p89 = scmp.eq.s32.totalorder %s16, 0
    %p90 = por %p88, %p89
    %s92 = sadd.s32 %s91, 1
    %p95 = scmp.eq.s32.totalorder %s10, 1
    %p96 = scmp.ne.s32.totalorder %s91, %s93
    %p97 = scmp.eq.s32.totalorder %s10, 0
    %p98 = por %p96, %p97
    %p99 = scmp.ne.s32.totalorder %s91, %s93
    %p100 = scmp.eq.s32.totalorder %s15, 1
    %p101 = por %p99, %p100
    %p102 = scmp.ne.s32.totalorder %s93, %s94
    %p103 = scmp.eq.s32.totalorder %s15, 0
    %p104 = por %p102, %p103
    %p105 = scmp.ne.s32.totalorder %s93, %s94
    %p106 = scmp.eq.s32.totalorder %s16, 1
    %p107 = por %p105, %p106
    %p109 = scmp.ne.s32.totalorder %s94, %s108
    %p110 = scmp.eq.s32.totalorder %s16, 0
    %p111 = por %p109, %p110
    %s112 = ssub.s32 %s10, %s17
    %p113 = scmp.eq.s32.totalorder %s112, 0
    %s115 = sadd.s32 %s114, 1
    %s116 = scalar_select %p113, %s114, %s115
    %p119 = pneg %p113
    %p120 = scmp.eq.s32.totalorder %s10, 1
    %p121 = por %p119, %p120
    %p122 = scmp.ne.s32.totalorder %s114, %s117
    %p123 = scmp.eq.s32.totalorder %s10, 0
    %p124 = por %p122, %p123
    %p125 = scmp.ne.s32.totalorder %s114, %s117
    %p126 = scmp.eq.s32.totalorder %s15, 1
    %p127 = por %p125, %p126
    %p128 = scmp.ne.s32.totalorder %s117, %s118
    %p129 = scmp.eq.s32.totalorder %s15, 0
    %p130 = por %p128, %p129
    %p131 = scmp.ne.s32.totalorder %s117, %s118
    %p132 = scmp.eq.s32.totalorder %s16, 1
    %p133 = por %p131, %p132
    %p135 = scmp.ne.s32.totalorder %s118, %s134
    %p136 = scmp.eq.s32.totalorder %s16, 0
    %p137 = por %p135, %p136
    %p138 = scmp.le.s32.totalorder 1, %s10
    %p139 = scmp.lt.s32.totalorder %s10, 3
    %p140 = pnand %p138, %p139
    %p141 = pneg %p140
    // Predicated region
    $region9: #{_forward_device.4} parent=5 // pred_check
      _
    $region10: #{_forward_device.4} parent=5 // pred_check_branch
      %143 = sbr.rel (%p140) target = $region12
    $region11: #{_forward_device.4} parent=5 // pred_region
      %s144 = ssub.s32 %s10, 1
      // Predicated region
      $region13: #{_forward_device.4} parent=11 // pred_check
        %p145 = pneg %p83
      $region14: #{_forward_device.4} parent=11 // pred_check_branch
        %147 = sbr.rel (%p145) target = $region16
      $region15: #{_forward_device.4} parent=11 // pred_region
        _
      $region16: #{_forward_device.4} parent=11 // pred_fallthru
        _
      // Predicated region
      $region17: #{_forward_device.4} parent=11 // pred_check
        %p148 = pneg %p104
      $region18: #{_forward_device.4} parent=11 // pred_check_branch
        %150 = sbr.rel (%p148) target = $region20
      $region19: #{_forward_device.4} parent=11 // pred_region
        _
      $region20: #{_forward_device.4} parent=11 // pred_fallthru
        _
    $region12: #{_forward_device.4} parent=5 // pred_fallthru
      _
    %p151 = scmp.lt.s32.totalorder %s10, 2
    // Predicated region
    $region21: #{_forward_device.4} parent=5 // pred_check
      %p152 = pneg %p151
    $region22: #{_forward_device.4} parent=5 // pred_check_branch
      %154 = sbr.rel (%p152) target = $region24
    $region23: #{_forward_device.4} parent=5 // pred_region
      // Predicated region
      $region25: #{_forward_device.4} parent=23 // pred_check
        %p155 = pneg %p30
      $region26: #{_forward_device.4} parent=23 // pred_check_branch
        %157 = sbr.rel (%p155) target = $region28
      $region27: #{_forward_device.4} parent=23 // pred_region
        %s158 = smul.u32 3, %s10
        %p159 = scmp.lt.s32.totalorder %s158, 5
        %s160 = scalar_select %p159, %s158, 5
        %s161 = smul.addr %s160, 4
        %s162 = scalar_lea.vmem %s0, %s161
        %s163 = smul.u32 3, %s10
      $region28: #{_forward_device.4} parent=23 // pred_fallthru
        _
      // Predicated region
      $region29: #{_forward_device.4} parent=23 // pred_check
        %p164 = pneg %p56
      $region30: #{_forward_device.4} parent=23 // pred_check_branch
        %166 = sbr.rel (%p164) target = $region32
      $region31: #{_forward_device.4} parent=23 // pred_region
        %s167 = smul.u32 3, %s10
        %p168 = scmp.lt.s32.totalorder %s167, 5
        %s169 = scalar_select %p168, %s167, 5
        %s170 = smul.addr %s169, 4
        %s171 = scalar_lea.vmem %s1, %s170
        %s172 = smul.u32 3, %s10
      $region32: #{_forward_device.4} parent=23 // pred_fallthru
        _
    $region24: #{_forward_device.4} parent=5 // pred_fallthru
      _
    %p173 = scmp.le.s32.totalorder 1, %s10
    %p174 = scmp.lt.s32.totalorder %s10, 3
    %p175 = pnand %p173, %p174
    %p176 = pneg %p175
    // Predicated region
    $region33: #{_forward_device.4} parent=5 // pred_check
      _
    $region34: #{_forward_device.4} parent=5 // pred_check_branch
      %178 = sbr.rel (%p175) target = $region36
    $region35: #{_forward_device.4} parent=5 // pred_region
      %s179 = ssub.s32 %s10, 1
      %s180 = smul.u32 3, %s15
      %p181 = scmp.lt.s32.totalorder %s180, 5
      %s182 = scalar_select %p181, %s180, 5
      %s183 = smul.addr %s182, 4
      %s184 = scalar_lea.vmem %s0, %s183
      %p185 = pneg %p36
      %p186 = pneg %p33
      %s187 = smul.u32 3, %s15
      %p188 = scmp.lt.s32.totalorder %s187, 5
      %s189 = scalar_select %p188, %s187, 5
      %s190 = smul.addr %s189, 4
      %s191 = scalar_lea.vmem %s1, %s190
      %p192 = pneg %p62
      %p193 = pneg %p59
      %p194 = pneg %p83
      %p195 = pneg %p80
      %p196 = pneg %p104
      %p197 = pneg %p101
      %p198 = pneg %p130
      %p199 = pneg %p127
      %s200 = smul.u32 3, %s15
      %p201 = scmp.lt.s32.totalorder %s200, 5
      %s202 = scalar_select %p201, %s200, 5
      %s203 = smul.addr %s202, 4
      %s204 = scalar_lea.vmem %s4, %s203
      %s205 = smul.u32 3, %s15
      %p206 = scmp.lt.s32.totalorder %s205, 5
      %s207 = scalar_select %p206, %s205, 5
      %s208 = smul.addr %s207, 4
      %s209 = scalar_lea.vmem %s0, %s208
      %s210 = smul.u32 3, %s15
      %s211 = smul.u32 3, %s15
      %p212 = scmp.lt.s32.totalorder %s211, 5
      %s213 = scalar_select %p212, %s211, 5
      %s214 = smul.addr %s213, 4
      %s215 = scalar_lea.vmem %s1, %s214
      %s216 = smul.u32 3, %s15
      %s217 = smul.u32 3, %s15
      %p218 = scmp.lt.s32.totalorder %s217, 5
      %s219 = scalar_select %p218, %s217, 5
      %s220 = smul.addr %s219, 4
      %s221 = scalar_lea.vmem %s4, %s220
      %s222 = smul.u32 3, %s15
      %v223 = vld [vmem:[%s209] sm:$0xff]
      %v224 = vld [vmem:[%s209 + $0x8] sm:$0xf]
      %v225 = vunpack.c.l.bf16 %v223
      %v226 = vunpack.c.h.bf16 %v223
      %v227 = vunpack.c.l.bf16 %v224
      %v228 = vld [vmem:[%s215] sm:$0xff]
      %v229 = vld [vmem:[%s215 + $0x8] sm:$0xf]
      %v230 = vunpack.c.l.bf16 %v228
      %v231 = vunpack.c.h.bf16 %v228
      %v232 = vunpack.c.l.bf16 %v229
      %v233 = vld [vmem:[%s2] sm:$0xff]
      %s234 = scalar_lea.vmem %s2, 8
      %v235 = vld [vmem:[%s234] sm:$0xff]
      %vm236 = vcmask 64512
      %v238 = vsel %vm236, %v235, 0
      %240 = vmatpush.msra.mxu0 0.0
      %241 = vmatpush.msra.mxu0 0.0
      %242 = vmatpush.msra.mxu0 0.0
      %243 = vmatpush.msra.mxu0 0.0
      %244 = vmatpush.msra.mxu0 0.0
      %245 = vmatpush.msra.mxu0 0.0
      %246 = vmatpush.msra.mxu0 0.0
      %247 = vmatpush.msra.mxu0 0.0
      %248 = vmatpush.msra.mxu0 0.0
      %249 = vmatpush.msra.mxu0 0.0
      %250 = vmatpush.msra.mxu0 0.0
      %251 = vmatpush.msra.mxu0 0.0
      %252 = vmatpush.msra.mxu0 0.0
      %253 = vmatpush.msra.mxu0 0.0
      %254 = vmatpush.msra.mxu0 0.0
      %255 = vmatpush.msra.mxu0 %v230
      %256 = vmatmul.f32.gmra.mxu0 %v238
      %v257 = vpop.f32.mrf.mxu0
      %v258 = vadd.f32 0.0, %v257
      %259 = vdwg.mxu0
      %260 = vmatpush.msra.mxu0 0.0
      %261 = vmatpush.msra.mxu0 0.0
      %262 = vmatpush.msra.mxu0 0.0
      %263 = vmatpush.msra.mxu0 0.0
      %264 = vmatpush.msra.mxu0 0.0
      %265 = vmatpush.msra.mxu0 0.0
      %266 = vmatpush.msra.mxu0 0.0
      %267 = vmatpush.msra.mxu0 0.0
      %268 = vmatpush.msra.mxu0 0.0
      %269 = vmatpush.msra.mxu0 0.0
      %270 = vmatpush.msra.mxu0 0.0
      %271 = vmatpush.msra.mxu0 0.0
      %272 = vmatpush.msra.mxu0 0.0
      %273 = vmatpush.msra.mxu0 0.0
      %274 = vmatpush.msra.mxu0 0.0
      %275 = vmatpush.msra.mxu0 %v231
      %276 = vmatmul.f32.gmra.mxu0 %v238
      %v277 = vpop.f32.mrf.mxu0
      %v278 = vadd.f32 0.0, %v277
      %279 = vdwg.mxu0
      %280 = vmatpush.msra.mxu0 0.0
      %281 = vmatpush.msra.mxu0 0.0
      %282 = vmatpush.msra.mxu0 0.0
      %283 = vmatpush.msra.mxu0 0.0
      %284 = vmatpush.msra.mxu0 0.0
      %285 = vmatpush.msra.mxu0 0.0
      %286 = vmatpush.msra.mxu0 0.0
      %287 = vmatpush.msra.mxu0 0.0
      %288 = vmatpush.msra.mxu0 0.0
      %289 = vmatpush.msra.mxu0 0.0
      %290 = vmatpush.msra.mxu0 0.0
      %291 = vmatpush.msra.mxu0 0.0
      %292 = vmatpush.msra.mxu0 0.0
      %293 = vmatpush.msra.mxu0 0.0
      %294 = vmatpush.msra.mxu0 0.0
      %295 = vmatpush.msra.mxu0 %v232
      %296 = vmatmul.f32.gmra.mxu0 %v238
      %v297 = vpop.f32.mrf.mxu0
      %v298 = vadd.f32 0.0, %v297
      %299 = vdwg.mxu0
      %v301 = vsel %vm236, %v233, 0
      %303 = vmatpush.msra.mxu0 0.0
      %304 = vmatpush.msra.mxu0 0.0
      %305 = vmatpush.msra.mxu0 0.0
      %306 = vmatpush.msra.mxu0 0.0
      %307 = vmatpush.msra.mxu0 0.0
      %308 = vmatpush.msra.mxu0 0.0
      %309 = vmatpush.msra.mxu0 0.0
      %310 = vmatpush.msra.mxu0 0.0
      %311 = vmatpush.msra.mxu0 0.0
      %312 = vmatpush.msra.mxu0 0.0
      %313 = vmatpush.msra.mxu0 0.0
      %314 = vmatpush.msra.mxu0 0.0
      %315 = vmatpush.msra.mxu0 0.0
      %316 = vmatpush.msra.mxu0 0.0
      %317 = vmatpush.msra.mxu0 0.0
      %318 = vmatpush.msra.mxu0 %v225
      %319 = vmatmul.f32.gmra.mxu0 %v301
      %v320 = vpop.f32.mrf.mxu0
      %v321 = vadd.f32 %v258, %v320
      %322 = vdwg.mxu0
      %323 = vmatpush.msra.mxu0 0.0
      %324 = vmatpush.msra.mxu0 0.0
      %325 = vmatpush.msra.mxu0 0.0
      %326 = vmatpush.msra.mxu0 0.0
      %327 = vmatpush.msra.mxu0 0.0
      %328 = vmatpush.msra.mxu0 0.0
      %329 = vmatpush.msra.mxu0 0.0
      %330 = vmatpush.msra.mxu0 0.0
      %331 = vmatpush.msra.mxu0 0.0
      %332 = vmatpush.msra.mxu0 0.0
      %333 = vmatpush.msra.mxu0 0.0
      %334 = vmatpush.msra.mxu0 0.0
      %335 = vmatpush.msra.mxu0 0.0
      %336 = vmatpush.msra.mxu0 0.0
      %337 = vmatpush.msra.mxu0 0.0
      %338 = vmatpush.msra.mxu0 %v226
      %339 = vmatmul.f32.gmra.mxu0 %v301
      %v340 = vpop.f32.mrf.mxu0
      %v341 = vadd.f32 %v278, %v340
      %342 = vdwg.mxu0
      %343 = vmatpush.msra.mxu0 0.0
      %344 = vmatpush.msra.mxu0 0.0
      %345 = vmatpush.msra.mxu0 0.0
      %346 = vmatpush.msra.mxu0 0.0
      %347 = vmatpush.msra.mxu0 0.0
      %348 = vmatpush.msra.mxu0 0.0
      %349 = vmatpush.msra.mxu0 0.0
      %350 = vmatpush.msra.mxu0 0.0
      %351 = vmatpush.msra.mxu0 0.0
      %352 = vmatpush.msra.mxu0 0.0
      %353 = vmatpush.msra.mxu0 0.0
      %354 = vmatpush.msra.mxu0 0.0
      %355 = vmatpush.msra.mxu0 0.0
      %356 = vmatpush.msra.mxu0 0.0
      %357 = vmatpush.msra.mxu0 0.0
      %358 = vmatpush.msra.mxu0 %v227
      %359 = vmatmul.f32.gmra.mxu0 %v301
      %v360 = vpop.f32.mrf.mxu0
      %v361 = vadd.f32 %v298, %v360
      %362 = vdwg.mxu0
      %v363 = vld [vmem:[%s3] sm:$0xff]
      %365 = vset.pattern.permute.xlu0 0
      %366 = vperm.xlu0 %365, %v363
      %v367 = vpop.permute.xlu0 %366
      %v369 = vadd.f32 %v321, %v367
      %v370 = vadd.f32 %v341, %v367
      %v371 = vadd.f32 %v361, %v367
      %v372 = vrot.slane %v369, 4
      %v373 = vadd.f32 %v369, %v372
      %v374 = vrot.slane %v373, 2
      %v375 = vadd.f32 %v373, %v374
      %v376 = vrot.slane %v375, 1
      %v377 = vadd.f32 %v375, %v376
      %v378 = vrot.slane %v370, 4
      %v379 = vadd.f32 %v370, %v378
      %v380 = vrot.slane %v379, 2
      %v381 = vadd.f32 %v379, %v380
      %v382 = vrot.slane %v381, 1
      %v383 = vadd.f32 %v381, %v382
      %v384 = vrot.slane %v371, 4
      %v385 = vadd.f32 %v371, %v384
      %v386 = vrot.slane %v385, 2
      %v387 = vadd.f32 %v385, %v386
      %v388 = vrot.slane %v387, 1
      %v389 = vadd.f32 %v387, %v388
      %v390 = vrcp.pop 8.0
      %v391 = vmul.f32 8.0, %v390
      %v392 = vsub.f32 1.0, %v391
      %v393 = vmul.f32 %v390, %v392
      %v394 = vadd.f32 %v390, %v393
      %vm395 = vweird.f32 %v390
      %v396 = vsel %vm395, %v390, %v394
      %v397 = vmul.f32 %v377, %v396
      %v398 = vmul.f32 %v383, %v396
      %v399 = vmul.f32 %v389, %v396
      %v400 = vsub.f32 %v369, %v397
      %v401 = vsub.f32 %v370, %v398
      %v402 = vsub.f32 %v371, %v399
      %v403 = vmul.f32 %v400, %v400
      %v404 = vmul.f32 %v401, %v401
      %v405 = vmul.f32 %v402, %v402
      %v406 = vrot.slane %v403, 4
      %v407 = vadd.f32 %v403, %v406
      %v408 = vrot.slane %v407, 2
      %v409 = vadd.f32 %v407, %v408
      %v410 = vrot.slane %v409, 1
      %v411 = vadd.f32 %v409, %v410
      %v412 = vrot.slane %v404, 4
      %v413 = vadd.f32 %v404, %v412
      %v414 = vrot.slane %v413, 2
      %v415 = vadd.f32 %v413, %v414
      %v416 = vrot.slane %v415, 1
      %v417 = vadd.f32 %v415, %v416
      %v418 = vrot.slane %v405, 4
      %v419 = vadd.f32 %v405, %v418
      %v420 = vrot.slane %v419, 2
      %v421 = vadd.f32 %v419, %v420
      %v422 = vrot.slane %v421, 1
      %v423 = vadd.f32 %v421, %v422
      %v424 = vmul.f32 %v411, %v396
      %v425 = vmul.f32 %v417, %v396
      %v426 = vmul.f32 %v423, %v396
      %v427 = vadd.f32 %v424, 1e-05
      %v428 = vadd.f32 %v425, 1e-05
      %v429 = vadd.f32 %v426, 1e-05
      %v430 = vrsqrt.pop %v427
      %v431 = vmul.f32 %v430, %v427
      %v432 = vmul.f32 %v431, %v430
      %v433 = vmul.f32 0.5, %v432
      %v434 = vsub.f32 1.5, %v433
      %v435 = vmul.f32 %v430, %v434
      %vm436 = vweird.f32 %v427
      %vm437 = vweird.f32 %v430
      %vm438 = vmor %vm436, %vm437
      %v439 = vsel %vm438, %v430, %v435
      %v440 = vrsqrt.pop %v428
      %v441 = vmul.f32 %v440, %v428
      %v442 = vmul.f32 %v441, %v440
      %v443 = vmul.f32 0.5, %v442
      %v444 = vsub.f32 1.5, %v443
      %v445 = vmul.f32 %v440, %v444
      %vm446 = vweird.f32 %v428
      %vm447 = vweird.f32 %v440
      %vm448 = vmor %vm446, %vm447
      %v449 = vsel %vm448, %v440, %v445
      %v450 = vrsqrt.pop %v429
      %v451 = vmul.f32 %v450, %v429
      %v452 = vmul.f32 %v451, %v450
      %v453 = vmul.f32 0.5, %v452
      %v454 = vsub.f32 1.5, %v453
      %v455 = vmul.f32 %v450, %v454
      %vm456 = vweird.f32 %v429
      %vm457 = vweird.f32 %v450
      %vm458 = vmor %vm456, %vm457
      %v459 = vsel %vm458, %v450, %v455
      %v460 = vmul.f32 %v400, %v439
      %v461 = vmul.f32 %v401, %v449
      %v462 = vmul.f32 %v402, %v459
      %463 = vset.pattern.permute.xlu0 1
      %464 = vperm.xlu0 %463, %v363
      %v465 = vpop.permute.xlu0 %464
      %v467 = vmul.f32 %v460, %v465
      %v468 = vmul.f32 %v461, %v465
      %v469 = vmul.f32 %v462, %v465
      %470 = vset.pattern.permute.xlu0 2
      %471 = vperm.xlu0 %470, %v363
      %v472 = vpop.permute.xlu0 %471
      %v474 = vadd.f32 %v467, %v472
      %v475 = vadd.f32 %v468, %v472
      %v476 = vadd.f32 %v469, %v472
      %v477 = vmax.f32 %v474, 0.0
      %v478 = vmax.f32 %v475, 0.0
      %v479 = vmax.f32 %v476, 0.0
      %v480 = vpack.c.bf16 %v478, %v477
      %v481 = vpack.c.bf16 %v479, %v479
      %482 = vst [vmem:[%s221] sm:$0xff] %v480
      %483 = vst [vmem:[%s221 + $0x8] sm:$0xf] %v481
      %s484 = smul.u32 3, %s15
      %p485 = scmp.lt.s32.totalorder %s484, 5
      %s486 = scalar_select %p485, %s484, 5
      %s487 = smul.addr %s486, 4
      %s488 = scalar_lea.vmem %s4, %s487
      // Predicated region
      $region37: #{_forward_device.4} parent=35 // pred_check
        %p489 = pneg %p127
      $region38: #{_forward_device.4} parent=35 // pred_check_branch
        %491 = sbr.rel (%p489) target = $region40
      $region39: #{_forward_device.4} parent=35 // pred_region
        %s492 = smul.u32 3, %s15
      $region40: #{_forward_device.4} parent=35 // pred_fallthru
        _
    $region36: #{_forward_device.4} parent=5 // pred_fallthru
      _
    %p493 = scmp.le.s32.totalorder 2, %s10
    // Predicated region
    $region41: #{_forward_device.4} parent=5 // pred_check
      %p494 = pneg %p493
    $region42: #{_forward_device.4} parent=5 // pred_check_branch
      %496 = sbr.rel (%p494) target = $region44
    $region43: #{_forward_device.4} parent=5 // pred_region
      %s497 = ssub.s32 %s10, 2
      // Predicated region
      $region45: #{_forward_device.4} parent=43 // pred_check
        %p498 = pneg %p133
      $region46: #{_forward_device.4} parent=43 // pred_check_branch
        %500 = sbr.rel (%p498) target = $region48
      $region47: #{_forward_device.4} parent=43 // pred_region
        %s501 = smul.u32 3, %s16
        %p502 = scmp.lt.s32.totalorder %s501, 5
        %s503 = scalar_select %p502, %s501, 5
        %s504 = smul.addr %s503, 4
        %s505 = scalar_lea.vmem %s4, %s504
      $region48: #{_forward_device.4} parent=43 // pred_fallthru
        _
    $region44: #{_forward_device.4} parent=5 // pred_fallthru
      _
  $region6: #{_forward_device.4} parent=0 // loop_footer
    %s14 = sadd.s32 1, %s10
  $region7: #{_forward_device.4} parent=0 // loop_footer_branch
    %9 = sbr.rel target = $region3
  $region8: #{_forward_device.4} parent=0 // loop_exit
    _

</llo_original>
